<compile_context>
chip_gen: v7x
topology: tpu7x:2x2x1
jax: 0.10.0
libtpu: 0.0.40
codegen_flags: <defaults>
</compile_context>

<pallas_src>
import functools

import jax
import jax.numpy as jnp
from jax.experimental import pallas as pl
from jax.experimental.pallas import tpu as pltpu


HIDDEN_DIM = 128
INPUT_DIM = 256
OUTPUT_DIM = 1


def _gru_fc_kernel(x_ref, wih_ref, whh_rz_ref, whh_n_ref, bcomb_ref, bhn_ref,
                   wfc_ref, bfc_ref, out_ref, *, seq_len, batch, hidden_dim):
    H = hidden_dim
    B = batch

    # Hoisted, h-independent input projection for ALL time steps at once:
    # (T*B, D_in)bf16 @ (D_in, 3H)bf16 -> f32, biases (b_ih + folded b_hr/b_hz)
    # added once.  Kept as a traced value, sliced statically per step.
    gi = (jnp.dot(x_ref[...], wih_ref[...], preferred_element_type=jnp.float32)
          + bcomb_ref[...])                              # (T*B, 3H) f32

    b_hn = jnp.broadcast_to(bhn_ref[...], (B, H))        # hoisted out of loop

    # t == 0: h0 == 0, so both recurrent matmuls vanish.
    gi0 = gi[0:B, :]
    r = jax.nn.sigmoid(gi0[:, :H])
    z = jax.nn.sigmoid(gi0[:, H:2 * H])
    n = jnp.tanh(gi0[:, 2 * H:] + r * b_hn)
    h = (1.0 - z) * n                                    # (B, H) f32, in vregs

    # Statically unrolled serial recurrence (T is small).  W_hh is read from
    # its VMEM refs inside the loop and split r/z vs n so the sigmoids (EUP)
    # overlap the MXU work of the second dot.
    for t in range(1, seq_len):
        gi_t = gi[t * B:(t + 1) * B, :]                  # static, tile-aligned
        h_bf = h.astype(jnp.bfloat16)
        gh_rz = jnp.dot(h_bf, whh_rz_ref[...],
                        preferred_element_type=jnp.float32)   # (B, 2H)
        r = jax.nn.sigmoid(gi_t[:, :H] + gh_rz[:, :H])
        z = jax.nn.sigmoid(gi_t[:, H:2 * H] + gh_rz[:, H:])
        gh_n = jnp.dot(h_bf, whh_n_ref[...],
                       preferred_element_type=jnp.float32)    # (B, H)
        n = jnp.tanh(gi_t[:, 2 * H:] + r * (gh_n + b_hn))
        h = (1.0 - z) * n + z * h

    # Fused final Linear with a lane-dense (padded-to-128) output slab.
    out = (jnp.dot(h.astype(jnp.bfloat16), wfc_ref[...],
                   preferred_element_type=jnp.float32) + bfc_ref[...])
    out_ref[...] = out.astype(out_ref.dtype)


def gnn_forward(x, params):
    """x: (B, T, INPUT_DIM) float32 -> (B, OUTPUT_DIM) float32."""
    B, T, D_in = x.shape
    H = params["w_hh"].shape[1]        # (3H, H) -> H
    O = params["w_fc"].shape[0]        # (O, H) -> O
    O_pad = -(-O // 128) * 128         # lane-dense output columns

    # Pad batch to a sublane multiple so time-major rows stay tile-aligned.
    B_pad = -(-B // 8) * 8
    if B_pad != B:
        x = jnp.pad(x, ((0, B_pad - B), (0, 0), (0, 0)))

    # Wrapper-side layout plumbing: time-major flattened rows, pre-transposed
    # weights, bf16 casts for all MXU operands (biases stay f32).
    x_2d = (jnp.transpose(x, (1, 0, 2)).reshape(T * B_pad, D_in)
            .astype(jnp.bfloat16))                           # (T*B, D_in)
    w_ih_t = params["w_ih"].T.astype(jnp.bfloat16)           # (D_in, 3H)
    w_hh_t = params["w_hh"].T                                # (H, 3H) f32
    w_hh_rz = w_hh_t[:, :2 * H].astype(jnp.bfloat16)         # (H, 2H)
    w_hh_n = w_hh_t[:, 2 * H:].astype(jnp.bfloat16)          # (H, H)
    # Fold b_hr / b_hz into the input bias; keep b_hn separate (it sits inside
    # the r * (h_n + b_hn) term).
    b_comb = (params["b_ih"]
              + jnp.concatenate([params["b_hh"][:2 * H],
                                 jnp.zeros((H,), params["b_hh"].dtype)])
              ).reshape(1, 3 * H).astype(jnp.float32)
    b_hn = params["b_hh"][2 * H:].reshape(1, H).astype(jnp.float32)
    # Lane-dense final FC: pad output dim to 128 lanes with zero columns;
    # column 0..O-1 are the real outputs, sliced off outside the kernel.
    w_fc_t = jnp.zeros((H, O_pad), jnp.float32).at[:, :O].set(params["w_fc"].T)
    w_fc_t = w_fc_t.astype(jnp.bfloat16)
    b_fc = jnp.zeros((1, O_pad), jnp.float32).at[:, :O].set(
        params["b_fc"].reshape(1, O))

    kernel = functools.partial(_gru_fc_kernel, seq_len=T, batch=B_pad,
                               hidden_dim=H)

    vmem = pl.BlockSpec(memory_space=pltpu.MemorySpace.VMEM)
    out = pl.pallas_call(
        kernel,
        out_shape=jax.ShapeDtypeStruct((B_pad, O_pad), jnp.float32),
        # Single invocation (no grid): everything fits comfortably in VMEM
        # (<0.5 MiB).  Explicit VMEM specs make residency deterministic.
        # NOTE: for long sequences / large stacked batches, chunk the input
        # projection over T and add a "parallel" batch grid axis (2 TCs on
        # v7x) instead of this gridless call.
        in_specs=[vmem] * 8,
        out_specs=vmem,
    )(x_2d, w_ih_t, w_hh_rz, w_hh_n, b_comb, b_hn, w_fc_t, b_fc)
    return out[:B, :O]


def _reference_f32(x, params):
    """Pure-JAX f32 reference mirroring torch.nn.GRU + Linear exactly."""
    B, T, _ = x.shape
    H = params["w_hh"].shape[1]
    h = jnp.zeros((B, H), jnp.float32)
    w_ih_t = params["w_ih"].T
    w_hh_t = params["w_hh"].T
    for t in range(T):
        gi = x[:, t, :] @ w_ih_t + params["b_ih"]
        gh = h @ w_hh_t + params["b_hh"]
        r = jax.nn.sigmoid(gi[:, :H] + gh[:, :H])
        z = jax.nn.sigmoid(gi[:, H:2 * H] + gh[:, H:2 * H])
        n = jnp.tanh(gi[:, 2 * H:] + r * gh[:, 2 * H:])
        h = (1.0 - z) * n + z * h
    return h @ params["w_fc"].T + params["b_fc"]


def _reference_bf16(x, params):
    """Reference with the same bf16-operand / f32-accumulate matmuls as the
    kernel (for a tight numerical check)."""
    B, T, _ = x.shape
    H = params["w_hh"].shape[1]
    h = jnp.zeros((B, H), jnp.float32)
    w_ih_t = params["w_ih"].T.astype(jnp.bfloat16)
    w_hh_t = params["w_hh"].T.astype(jnp.bfloat16)
    xb = x.astype(jnp.bfloat16)
    for t in range(T):
        gi = jnp.dot(xb[:, t, :], w_ih_t,
                     preferred_element_type=jnp.float32) + params["b_ih"]
        gh = jnp.dot(h.astype(jnp.bfloat16), w_hh_t,
                     preferred_element_type=jnp.float32) + params["b_hh"]
        r = jax.nn.sigmoid(gi[:, :H] + gh[:, :H])
        z = jax.nn.sigmoid(gi[:, H:2 * H] + gh[:, H:2 * H])
        n = jnp.tanh(gi[:, 2 * H:] + r * gh[:, 2 * H:])
        h = (1.0 - z) * n + z * h
    return (jnp.dot(h.astype(jnp.bfloat16),
                    params["w_fc"].T.astype(jnp.bfloat16),
                    preferred_element_type=jnp.float32) + params["b_fc"])


def init_params(key, input_dim, hidden_dim, output_dim):
    """Deterministic init mimicking PyTorch's U(-1/sqrt(H), 1/sqrt(H))."""
    ks = jax.random.split(key, 6)
    s = 1.0 / jnp.sqrt(hidden_dim)
    u = lambda k, shape: jax.random.uniform(k, shape, jnp.float32, -s, s)
    return {
        "w_ih": u(ks[0], (3 * hidden_dim, input_dim)),
        "w_hh": u(ks[1], (3 * hidden_dim, hidden_dim)),
        "b_ih": u(ks[2], (3 * hidden_dim,)),
        "b_hh": u(ks[3], (3 * hidden_dim,)),
        "w_fc": u(ks[4], (output_dim, hidden_dim)),
        "b_fc": u(ks[5], (output_dim,)),
    }


if __name__ == "__main__":
    key = jax.random.PRNGKey(0)
    k_param, k_x = jax.random.split(key)

    B, T = 8, 6
    params = init_params(k_param, INPUT_DIM, HIDDEN_DIM, OUTPUT_DIM)
    x = jax.random.normal(k_x, (B, T, INPUT_DIM), jnp.float32)

    out = jax.block_until_ready(gnn_forward(x, params))
    assert out.shape == (B, OUTPUT_DIM), out.shape

    # Tight check against a reference that uses matching bf16 MXU operands.
    ref_bf16 = _reference_bf16(x, params)
    assert jnp.allclose(out, ref_bf16, atol=2e-3, rtol=2e-3), (
        f"bf16-matched max abs diff {jnp.max(jnp.abs(out - ref_bf16))}")

    # Loose sanity check against exact f32 torch.nn.GRU semantics (bf16 MXU
    # rounding accumulates over the T recurrent steps).
    ref_f32 = _reference_f32(x, params)
    assert jnp.allclose(out, ref_f32, atol=5e-2, rtol=5e-2), (
        f"f32 max abs diff {jnp.max(jnp.abs(out - ref_f32))}")

    print("KERNEL_OK")
</pallas_src>

<mosaic_0001>
module attributes {stable_mosaic.version = 11 : i64} {
  func.func @_gru_fc_kernel(%arg0: memref<48x256xbf16, #tpu.memory_space<vmem>>, %arg1: memref<256x384xbf16, #tpu.memory_space<vmem>>, %arg2: memref<128x256xbf16, #tpu.memory_space<vmem>>, %arg3: memref<128x128xbf16, #tpu.memory_space<vmem>>, %arg4: memref<1x384xf32, #tpu.memory_space<vmem>>, %arg5: memref<1x128xf32, #tpu.memory_space<vmem>>, %arg6: memref<128x128xbf16, #tpu.memory_space<vmem>>, %arg7: memref<1x128xf32, #tpu.memory_space<vmem>>, %arg8: memref<8x128xf32, #tpu.memory_space<vmem>>) attributes {dimension_semantics = [], scalar_prefetch = 0 : i64, scratch_operands = 0 : i64, tpu.core_type = #tpu.core_type<tc>} {
    %c0 = arith.constant 0 : index
    %c0_0 = arith.constant 0 : index
    %0 = vector.load %arg0[%c0, %c0_0] : memref<48x256xbf16, #tpu.memory_space<vmem>>, vector<48x256xbf16>
    %c0_1 = arith.constant 0 : index
    %c0_2 = arith.constant 0 : index
    %1 = vector.load %arg1[%c0_1, %c0_2] : memref<256x384xbf16, #tpu.memory_space<vmem>>, vector<256x384xbf16>
    %cst = arith.constant dense<0.000000e+00> : vector<48x384xf32>
    %2 = tpu.matmul %0, %1, %cst {dimension_numbers = #tpu.dot_dimension_numbers<[1], [0], [0], [1], [0, 0, 1, 1], [], []>} : vector<48x256xbf16>, vector<256x384xbf16>, vector<48x384xf32> -> vector<48x384xf32>
    %c0_3 = arith.constant 0 : index
    %c0_4 = arith.constant 0 : index
    %3 = vector.load %arg4[%c0_3, %c0_4] : memref<1x384xf32, #tpu.memory_space<vmem>>, vector<1x384xf32>
    %4 = vector.broadcast %3 : vector<1x384xf32> to vector<48x384xf32>
    %5 = arith.addf %2, %4 : vector<48x384xf32>
    %c0_5 = arith.constant 0 : index
    %c0_6 = arith.constant 0 : index
    %6 = vector.load %arg5[%c0_5, %c0_6] : memref<1x128xf32, #tpu.memory_space<vmem>>, vector<1x128xf32>
    %7 = vector.shape_cast %6 : vector<1x128xf32> to vector<1x128xf32>
    %8 = vector.broadcast %7 : vector<1x128xf32> to vector<8x128xf32>
    %9 = vector.extract_strided_slice %5 {offsets = [0, 0], sizes = [8, 384], strides = [1, 1]} : vector<48x384xf32> to vector<8x384xf32>
    %10 = vector.extract_strided_slice %9 {offsets = [0, 0], sizes = [8, 128], strides = [1, 1]} : vector<8x384xf32> to vector<8x128xf32>
    %11 = arith.negf %10 : vector<8x128xf32>
    %12 = math.exp %11 : vector<8x128xf32>
    %cst_7 = arith.constant 1.000000e+00 : f32
    %13 = vector.broadcast %cst_7 : f32 to vector<8x128xf32>
    %14 = arith.addf %13, %12 : vector<8x128xf32>
    %15 = arith.divf %13, %14 : vector<8x128xf32>
    %16 = vector.extract_strided_slice %9 {offsets = [0, 128], sizes = [8, 128], strides = [1, 1]} : vector<8x384xf32> to vector<8x128xf32>
    %17 = arith.negf %16 : vector<8x128xf32>
    %18 = math.exp %17 : vector<8x128xf32>
    %cst_8 = arith.constant 1.000000e+00 : f32
    %19 = vector.broadcast %cst_8 : f32 to vector<8x128xf32>
    %20 = arith.addf %19, %18 : vector<8x128xf32>
    %21 = arith.divf %19, %20 : vector<8x128xf32>
    %22 = vector.extract_strided_slice %9 {offsets = [0, 256], sizes = [8, 128], strides = [1, 1]} : vector<8x384xf32> to vector<8x128xf32>
    %23 = arith.mulf %15, %8 : vector<8x128xf32>
    %24 = arith.addf %22, %23 : vector<8x128xf32>
    %25 = math.tanh %24 : vector<8x128xf32>
    %cst_9 = arith.constant 1.000000e+00 : f32
    %26 = vector.broadcast %cst_9 : f32 to vector<8x128xf32>
    %27 = arith.subf %26, %21 : vector<8x128xf32>
    %28 = arith.mulf %27, %25 : vector<8x128xf32>
    %29 = vector.extract_strided_slice %5 {offsets = [8, 0], sizes = [8, 384], strides = [1, 1]} : vector<48x384xf32> to vector<8x384xf32>
    %30 = arith.truncf %28 : vector<8x128xf32> to vector<8x128xbf16>
    %c0_10 = arith.constant 0 : index
    %c0_11 = arith.constant 0 : index
    %31 = vector.load %arg2[%c0_10, %c0_11] : memref<128x256xbf16, #tpu.memory_space<vmem>>, vector<128x256xbf16>
    %cst_12 = arith.constant dense<0.000000e+00> : vector<8x256xf32>
    %32 = tpu.matmul %30, %31, %cst_12 {dimension_numbers = #tpu.dot_dimension_numbers<[1], [0], [0], [1], [0, 0, 1, 1], [], []>} : vector<8x128xbf16>, vector<128x256xbf16>, vector<8x256xf32> -> vector<8x256xf32>
    %33 = vector.extract_strided_slice %29 {offsets = [0, 0], sizes = [8, 128], strides = [1, 1]} : vector<8x384xf32> to vector<8x128xf32>
    %34 = vector.extract_strided_slice %32 {offsets = [0, 0], sizes = [8, 128], strides = [1, 1]} : vector<8x256xf32> to vector<8x128xf32>
    %35 = arith.addf %33, %34 : vector<8x128xf32>
    %36 = arith.negf %35 : vector<8x128xf32>
    %37 = math.exp %36 : vector<8x128xf32>
    %cst_13 = arith.constant 1.000000e+00 : f32
    %38 = vector.broadcast %cst_13 : f32 to vector<8x128xf32>
    %39 = arith.addf %38, %37 : vector<8x128xf32>
    %40 = arith.divf %38, %39 : vector<8x128xf32>
    %41 = vector.extract_strided_slice %29 {offsets = [0, 128], sizes = [8, 128], strides = [1, 1]} : vector<8x384xf32> to vector<8x128xf32>
    %42 = vector.extract_strided_slice %32 {offsets = [0, 128], sizes = [8, 128], strides = [1, 1]} : vector<8x256xf32> to vector<8x128xf32>
    %43 = arith.addf %41, %42 : vector<8x128xf32>
    %44 = arith.negf %43 : vector<8x128xf32>
    %45 = math.exp %44 : vector<8x128xf32>
    %cst_14 = arith.constant 1.000000e+00 : f32
    %46 = vector.broadcast %cst_14 : f32 to vector<8x128xf32>
    %47 = arith.addf %46, %45 : vector<8x128xf32>
    %48 = arith.divf %46, %47 : vector<8x128xf32>
    %c0_15 = arith.constant 0 : index
    %c0_16 = arith.constant 0 : index
    %49 = vector.load %arg3[%c0_15, %c0_16] : memref<128x128xbf16, #tpu.memory_space<vmem>>, vector<128x128xbf16>
    %cst_17 = arith.constant dense<0.000000e+00> : vector<8x128xf32>
    %50 = tpu.matmul %30, %49, %cst_17 {dimension_numbers = #tpu.dot_dimension_numbers<[1], [0], [0], [1], [0, 0, 1, 1], [], []>} : vector<8x128xbf16>, vector<128x128xbf16>, vector<8x128xf32> -> vector<8x128xf32>
    %51 = vector.extract_strided_slice %29 {offsets = [0, 256], sizes = [8, 128], strides = [1, 1]} : vector<8x384xf32> to vector<8x128xf32>
    %52 = arith.addf %50, %8 : vector<8x128xf32>
    %53 = arith.mulf %40, %52 : vector<8x128xf32>
    %54 = arith.addf %51, %53 : vector<8x128xf32>
    %55 = math.tanh %54 : vector<8x128xf32>
    %cst_18 = arith.constant 1.000000e+00 : f32
    %56 = vector.broadcast %cst_18 : f32 to vector<8x128xf32>
    %57 = arith.subf %56, %48 : vector<8x128xf32>
    %58 = arith.mulf %57, %55 : vector<8x128xf32>
    %59 = arith.mulf %48, %28 : vector<8x128xf32>
    %60 = arith.addf %58, %59 : vector<8x128xf32>
    %61 = vector.extract_strided_slice %5 {offsets = [16, 0], sizes = [8, 384], strides = [1, 1]} : vector<48x384xf32> to vector<8x384xf32>
    %62 = arith.truncf %60 : vector<8x128xf32> to vector<8x128xbf16>
    %c0_19 = arith.constant 0 : index
    %c0_20 = arith.constant 0 : index
    %63 = vector.load %arg2[%c0_19, %c0_20] : memref<128x256xbf16, #tpu.memory_space<vmem>>, vector<128x256xbf16>
    %cst_21 = arith.constant dense<0.000000e+00> : vector<8x256xf32>
    %64 = tpu.matmul %62, %63, %cst_21 {dimension_numbers = #tpu.dot_dimension_numbers<[1], [0], [0], [1], [0, 0, 1, 1], [], []>} : vector<8x128xbf16>, vector<128x256xbf16>, vector<8x256xf32> -> vector<8x256xf32>
    %65 = vector.extract_strided_slice %61 {offsets = [0, 0], sizes = [8, 128], strides = [1, 1]} : vector<8x384xf32> to vector<8x128xf32>
    %66 = vector.extract_strided_slice %64 {offsets = [0, 0], sizes = [8, 128], strides = [1, 1]} : vector<8x256xf32> to vector<8x128xf32>
    %67 = arith.addf %65, %66 : vector<8x128xf32>
    %68 = arith.negf %67 : vector<8x128xf32>
    %69 = math.exp %68 : vector<8x128xf32>
    %cst_22 = arith.constant 1.000000e+00 : f32
    %70 = vector.broadcast %cst_22 : f32 to vector<8x128xf32>
    %71 = arith.addf %70, %69 : vector<8x128xf32>
    %72 = arith.divf %70, %71 : vector<8x128xf32>
    %73 = vector.extract_strided_slice %61 {offsets = [0, 128], sizes = [8, 128], strides = [1, 1]} : vector<8x384xf32> to vector<8x128xf32>
    %74 = vector.extract_strided_slice %64 {offsets = [0, 128], sizes = [8, 128], strides = [1, 1]} : vector<8x256xf32> to vector<8x128xf32>
    %75 = arith.addf %73, %74 : vector<8x128xf32>
    %76 = arith.negf %75 : vector<8x128xf32>
    %77 = math.exp %76 : vector<8x128xf32>
    %cst_23 = arith.constant 1.000000e+00 : f32
    %78 = vector.broadcast %cst_23 : f32 to vector<8x128xf32>
    %79 = arith.addf %78, %77 : vector<8x128xf32>
    %80 = arith.divf %78, %79 : vector<8x128xf32>
    %c0_24 = arith.constant 0 : index
    %c0_25 = arith.constant 0 : index
    %81 = vector.load %arg3[%c0_24, %c0_25] : memref<128x128xbf16, #tpu.memory_space<vmem>>, vector<128x128xbf16>
    %cst_26 = arith.constant dense<0.000000e+00> : vector<8x128xf32>
    %82 = tpu.matmul %62, %81, %cst_26 {dimension_numbers = #tpu.dot_dimension_numbers<[1], [0], [0], [1], [0, 0, 1, 1], [], []>} : vector<8x128xbf16>, vector<128x128xbf16>, vector<8x128xf32> -> vector<8x128xf32>
    %83 = vector.extract_strided_slice %61 {offsets = [0, 256], sizes = [8, 128], strides = [1, 1]} : vector<8x384xf32> to vector<8x128xf32>
    %84 = arith.addf %82, %8 : vector<8x128xf32>
    %85 = arith.mulf %72, %84 : vector<8x128xf32>
    %86 = arith.addf %83, %85 : vector<8x128xf32>
    %87 = math.tanh %86 : vector<8x128xf32>
    %cst_27 = arith.constant 1.000000e+00 : f32
    %88 = vector.broadcast %cst_27 : f32 to vector<8x128xf32>
    %89 = arith.subf %88, %80 : vector<8x128xf32>
    %90 = arith.mulf %89, %87 : vector<8x128xf32>
    %91 = arith.mulf %80, %60 : vector<8x128xf32>
    %92 = arith.addf %90, %91 : vector<8x128xf32>
    %93 = vector.extract_strided_slice %5 {offsets = [24, 0], sizes = [8, 384], strides = [1, 1]} : vector<48x384xf32> to vector<8x384xf32>
    %94 = arith.truncf %92 : vector<8x128xf32> to vector<8x128xbf16>
    %c0_28 = arith.constant 0 : index
    %c0_29 = arith.constant 0 : index
    %95 = vector.load %arg2[%c0_28, %c0_29] : memref<128x256xbf16, #tpu.memory_space<vmem>>, vector<128x256xbf16>
    %cst_30 = arith.constant dense<0.000000e+00> : vector<8x256xf32>
    %96 = tpu.matmul %94, %95, %cst_30 {dimension_numbers = #tpu.dot_dimension_numbers<[1], [0], [0], [1], [0, 0, 1, 1], [], []>} : vector<8x128xbf16>, vector<128x256xbf16>, vector<8x256xf32> -> vector<8x256xf32>
    %97 = vector.extract_strided_slice %93 {offsets = [0, 0], sizes = [8, 128], strides = [1, 1]} : vector<8x384xf32> to vector<8x128xf32>
    %98 = vector.extract_strided_slice %96 {offsets = [0, 0], sizes = [8, 128], strides = [1, 1]} : vector<8x256xf32> to vector<8x128xf32>
    %99 = arith.addf %97, %98 : vector<8x128xf32>
    %100 = arith.negf %99 : vector<8x128xf32>
    %101 = math.exp %100 : vector<8x128xf32>
    %cst_31 = arith.constant 1.000000e+00 : f32
    %102 = vector.broadcast %cst_31 : f32 to vector<8x128xf32>
    %103 = arith.addf %102, %101 : vector<8x128xf32>
    %104 = arith.divf %102, %103 : vector<8x128xf32>
    %105 = vector.extract_strided_slice %93 {offsets = [0, 128], sizes = [8, 128], strides = [1, 1]} : vector<8x384xf32> to vector<8x128xf32>
    %106 = vector.extract_strided_slice %96 {offsets = [0, 128], sizes = [8, 128], strides = [1, 1]} : vector<8x256xf32> to vector<8x128xf32>
    %107 = arith.addf %105, %106 : vector<8x128xf32>
    %108 = arith.negf %107 : vector<8x128xf32>
    %109 = math.exp %108 : vector<8x128xf32>
    %cst_32 = arith.constant 1.000000e+00 : f32
    %110 = vector.broadcast %cst_32 : f32 to vector<8x128xf32>
    %111 = arith.addf %110, %109 : vector<8x128xf32>
    %112 = arith.divf %110, %111 : vector<8x128xf32>
    %c0_33 = arith.constant 0 : index
    %c0_34 = arith.constant 0 : index
    %113 = vector.load %arg3[%c0_33, %c0_34] : memref<128x128xbf16, #tpu.memory_space<vmem>>, vector<128x128xbf16>
    %cst_35 = arith.constant dense<0.000000e+00> : vector<8x128xf32>
    %114 = tpu.matmul %94, %113, %cst_35 {dimension_numbers = #tpu.dot_dimension_numbers<[1], [0], [0], [1], [0, 0, 1, 1], [], []>} : vector<8x128xbf16>, vector<128x128xbf16>, vector<8x128xf32> -> vector<8x128xf32>
    %115 = vector.extract_strided_slice %93 {offsets = [0, 256], sizes = [8, 128], strides = [1, 1]} : vector<8x384xf32> to vector<8x128xf32>
    %116 = arith.addf %114, %8 : vector<8x128xf32>
    %117 = arith.mulf %104, %116 : vector<8x128xf32>
    %118 = arith.addf %115, %117 : vector<8x128xf32>
    %119 = math.tanh %118 : vector<8x128xf32>
    %cst_36 = arith.constant 1.000000e+00 : f32
    %120 = vector.broadcast %cst_36 : f32 to vector<8x128xf32>
    %121 = arith.subf %120, %112 : vector<8x128xf32>
    %122 = arith.mulf %121, %119 : vector<8x128xf32>
    %123 = arith.mulf %112, %92 : vector<8x128xf32>
    %124 = arith.addf %122, %123 : vector<8x128xf32>
    %125 = vector.extract_strided_slice %5 {offsets = [32, 0], sizes = [8, 384], strides = [1, 1]} : vector<48x384xf32> to vector<8x384xf32>
    %126 = arith.truncf %124 : vector<8x128xf32> to vector<8x128xbf16>
    %c0_37 = arith.constant 0 : index
    %c0_38 = arith.constant 0 : index
    %127 = vector.load %arg2[%c0_37, %c0_38] : memref<128x256xbf16, #tpu.memory_space<vmem>>, vector<128x256xbf16>
    %cst_39 = arith.constant dense<0.000000e+00> : vector<8x256xf32>
    %128 = tpu.matmul %126, %127, %cst_39 {dimension_numbers = #tpu.dot_dimension_numbers<[1], [0], [0], [1], [0, 0, 1, 1], [], []>} : vector<8x128xbf16>, vector<128x256xbf16>, vector<8x256xf32> -> vector<8x256xf32>
    %129 = vector.extract_strided_slice %125 {offsets = [0, 0], sizes = [8, 128], strides = [1, 1]} : vector<8x384xf32> to vector<8x128xf32>
    %130 = vector.extract_strided_slice %128 {offsets = [0, 0], sizes = [8, 128], strides = [1, 1]} : vector<8x256xf32> to vector<8x128xf32>
    %131 = arith.addf %129, %130 : vector<8x128xf32>
    %132 = arith.negf %131 : vector<8x128xf32>
    %133 = math.exp %132 : vector<8x128xf32>
    %cst_40 = arith.constant 1.000000e+00 : f32
    %134 = vector.broadcast %cst_40 : f32 to vector<8x128xf32>
    %135 = arith.addf %134, %133 : vector<8x128xf32>
    %136 = arith.divf %134, %135 : vector<8x128xf32>
    %137 = vector.extract_strided_slice %125 {offsets = [0, 128], sizes = [8, 128], strides = [1, 1]} : vector<8x384xf32> to vector<8x128xf32>
    %138 = vector.extract_strided_slice %128 {offsets = [0, 128], sizes = [8, 128], strides = [1, 1]} : vector<8x256xf32> to vector<8x128xf32>
    %139 = arith.addf %137, %138 : vector<8x128xf32>
    %140 = arith.negf %139 : vector<8x128xf32>
    %141 = math.exp %140 : vector<8x128xf32>
    %cst_41 = arith.constant 1.000000e+00 : f32
    %142 = vector.broadcast %cst_41 : f32 to vector<8x128xf32>
    %143 = arith.addf %142, %141 : vector<8x128xf32>
    %144 = arith.divf %142, %143 : vector<8x128xf32>
    %c0_42 = arith.constant 0 : index
    %c0_43 = arith.constant 0 : index
    %145 = vector.load %arg3[%c0_42, %c0_43] : memref<128x128xbf16, #tpu.memory_space<vmem>>, vector<128x128xbf16>
    %cst_44 = arith.constant dense<0.000000e+00> : vector<8x128xf32>
    %146 = tpu.matmul %126, %145, %cst_44 {dimension_numbers = #tpu.dot_dimension_numbers<[1], [0], [0], [1], [0, 0, 1, 1], [], []>} : vector<8x128xbf16>, vector<128x128xbf16>, vector<8x128xf32> -> vector<8x128xf32>
    %147 = vector.extract_strided_slice %125 {offsets = [0, 256], sizes = [8, 128], strides = [1, 1]} : vector<8x384xf32> to vector<8x128xf32>
    %148 = arith.addf %146, %8 : vector<8x128xf32>
    %149 = arith.mulf %136, %148 : vector<8x128xf32>
    %150 = arith.addf %147, %149 : vector<8x128xf32>
    %151 = math.tanh %150 : vector<8x128xf32>
    %cst_45 = arith.constant 1.000000e+00 : f32
    %152 = vector.broadcast %cst_45 : f32 to vector<8x128xf32>
    %153 = arith.subf %152, %144 : vector<8x128xf32>
    %154 = arith.mulf %153, %151 : vector<8x128xf32>
    %155 = arith.mulf %144, %124 : vector<8x128xf32>
    %156 = arith.addf %154, %155 : vector<8x128xf32>
    %157 = vector.extract_strided_slice %5 {offsets = [40, 0], sizes = [8, 384], strides = [1, 1]} : vector<48x384xf32> to vector<8x384xf32>
    %158 = arith.truncf %156 : vector<8x128xf32> to vector<8x128xbf16>
    %c0_46 = arith.constant 0 : index
    %c0_47 = arith.constant 0 : index
    %159 = vector.load %arg2[%c0_46, %c0_47] : memref<128x256xbf16, #tpu.memory_space<vmem>>, vector<128x256xbf16>
    %cst_48 = arith.constant dense<0.000000e+00> : vector<8x256xf32>
    %160 = tpu.matmul %158, %159, %cst_48 {dimension_numbers = #tpu.dot_dimension_numbers<[1], [0], [0], [1], [0, 0, 1, 1], [], []>} : vector<8x128xbf16>, vector<128x256xbf16>, vector<8x256xf32> -> vector<8x256xf32>
    %161 = vector.extract_strided_slice %157 {offsets = [0, 0], sizes = [8, 128], strides = [1, 1]} : vector<8x384xf32> to vector<8x128xf32>
    %162 = vector.extract_strided_slice %160 {offsets = [0, 0], sizes = [8, 128], strides = [1, 1]} : vector<8x256xf32> to vector<8x128xf32>
    %163 = arith.addf %161, %162 : vector<8x128xf32>
    %164 = arith.negf %163 : vector<8x128xf32>
    %165 = math.exp %164 : vector<8x128xf32>
    %cst_49 = arith.constant 1.000000e+00 : f32
    %166 = vector.broadcast %cst_49 : f32 to vector<8x128xf32>
    %167 = arith.addf %166, %165 : vector<8x128xf32>
    %168 = arith.divf %166, %167 : vector<8x128xf32>
    %169 = vector.extract_strided_slice %157 {offsets = [0, 128], sizes = [8, 128], strides = [1, 1]} : vector<8x384xf32> to vector<8x128xf32>
    %170 = vector.extract_strided_slice %160 {offsets = [0, 128], sizes = [8, 128], strides = [1, 1]} : vector<8x256xf32> to vector<8x128xf32>
    %171 = arith.addf %169, %170 : vector<8x128xf32>
    %172 = arith.negf %171 : vector<8x128xf32>
    %173 = math.exp %172 : vector<8x128xf32>
    %cst_50 = arith.constant 1.000000e+00 : f32
    %174 = vector.broadcast %cst_50 : f32 to vector<8x128xf32>
    %175 = arith.addf %174, %173 : vector<8x128xf32>
    %176 = arith.divf %174, %175 : vector<8x128xf32>
    %c0_51 = arith.constant 0 : index
    %c0_52 = arith.constant 0 : index
    %177 = vector.load %arg3[%c0_51, %c0_52] : memref<128x128xbf16, #tpu.memory_space<vmem>>, vector<128x128xbf16>
    %cst_53 = arith.constant dense<0.000000e+00> : vector<8x128xf32>
    %178 = tpu.matmul %158, %177, %cst_53 {dimension_numbers = #tpu.dot_dimension_numbers<[1], [0], [0], [1], [0, 0, 1, 1], [], []>} : vector<8x128xbf16>, vector<128x128xbf16>, vector<8x128xf32> -> vector<8x128xf32>
    %179 = vector.extract_strided_slice %157 {offsets = [0, 256], sizes = [8, 128], strides = [1, 1]} : vector<8x384xf32> to vector<8x128xf32>
    %180 = arith.addf %178, %8 : vector<8x128xf32>
    %181 = arith.mulf %168, %180 : vector<8x128xf32>
    %182 = arith.addf %179, %181 : vector<8x128xf32>
    %183 = math.tanh %182 : vector<8x128xf32>
    %cst_54 = arith.constant 1.000000e+00 : f32
    %184 = vector.broadcast %cst_54 : f32 to vector<8x128xf32>
    %185 = arith.subf %184, %176 : vector<8x128xf32>
    %186 = arith.mulf %185, %183 : vector<8x128xf32>
    %187 = arith.mulf %176, %156 : vector<8x128xf32>
    %188 = arith.addf %186, %187 : vector<8x128xf32>
    %189 = arith.truncf %188 : vector<8x128xf32> to vector<8x128xbf16>
    %c0_55 = arith.constant 0 : index
    %c0_56 = arith.constant 0 : index
    %190 = vector.load %arg6[%c0_55, %c0_56] : memref<128x128xbf16, #tpu.memory_space<vmem>>, vector<128x128xbf16>
    %cst_57 = arith.constant dense<0.000000e+00> : vector<8x128xf32>
    %191 = tpu.matmul %189, %190, %cst_57 {dimension_numbers = #tpu.dot_dimension_numbers<[1], [0], [0], [1], [0, 0, 1, 1], [], []>} : vector<8x128xbf16>, vector<128x128xbf16>, vector<8x128xf32> -> vector<8x128xf32>
    %c0_58 = arith.constant 0 : index
    %c0_59 = arith.constant 0 : index
    %192 = vector.load %arg7[%c0_58, %c0_59] : memref<1x128xf32, #tpu.memory_space<vmem>>, vector<1x128xf32>
    %193 = vector.broadcast %192 : vector<1x128xf32> to vector<8x128xf32>
    %194 = arith.addf %191, %193 : vector<8x128xf32>
    %c0_60 = arith.constant 0 : index
    %c0_61 = arith.constant 0 : index
    %195 = vector.load %arg8[%c0_60, %c0_61] : memref<8x128xf32, #tpu.memory_space<vmem>>, vector<8x128xf32>
    tpu.vector_store %arg8[%c0_60, %c0_61], %194 {strides = array<i32>} : memref<8x128xf32, #tpu.memory_space<vmem>>, vector<8x128xf32>,
    return
  }
}

</mosaic_0001>

<llo_original>
// kernel: tpu_custom_call.1
$region0: #{tpu_custom_call.1}
  #allocation0 [shape = 'u32[]', space=smem, size = 0x4, offset = 0x4, fixed_abs, tag = 'smem constant byte address 0x4 - core index']
  #allocation1 [shape = 'u32[144,128]{1,0:T(1,128)}', space=vmem, size = 0x12000, scoped, tag = 'internal scratch']
  %s0 = inlined_call_operand.hbm [shape: bf16[48,256], index: 0, kind: input, shape index: {}]
  %s1 = inlined_call_operand.hbm [shape: bf16[256,384], index: 1, kind: input, shape index: {}]
  %s2 = inlined_call_operand.hbm [shape: bf16[128,256], index: 2, kind: input, shape index: {}]
  %s3 = inlined_call_operand.hbm [shape: bf16[128,128], index: 3, kind: input, shape index: {}]
  %s4 = inlined_call_operand.vmem [shape: f32[1,384], index: 4, kind: input, shape index: {}]
  %s5 = inlined_call_operand.vmem [shape: f32[1,128], index: 5, kind: input, shape index: {}]
  %s6 = inlined_call_operand.hbm [shape: bf16[128,128], index: 6, kind: input, shape index: {}]
  %s7 = inlined_call_operand.vmem [shape: f32[1,128], index: 7, kind: input, shape index: {}]
  %s8 = inlined_call_operand.hbm [shape: f32[8,128], index: 8, kind: output, shape index: {}]
  %s9 = sld [smem:[#allocation0]]
  $region62: #{tpu_custom_call.1} parent=0
    _
  %s11 = ssub.s32 1, %s9
  %s12 = scalar_select 0, %s11, %s9
  $region1: #{tpu_custom_call.1} parent=0
    #allocation2 [shape = 'u8[24576]{0}', space=vmem, size = 0x6000, scoped, tag = 'input window, operand 0, single buffered']
    #allocation3 [shape = 's32[1]{0}', space=sflag, size = 0x4, scoped, tag = 'scoped memory for tpu_custom_call.1']
    #allocation4 [shape = 's32[1]{0}', space=sflag, size = 0x4, scoped, tag = 'scoped memory for tpu_custom_call.1']
    #allocation5 [shape = 'u8[196608]{0}', space=vmem, size = 0x30000, scoped, tag = 'input window, operand 1, single buffered']
    #allocation6 [shape = 's32[1]{0}', space=sflag, size = 0x4, scoped, tag = 'scoped memory for tpu_custom_call.1']
    #allocation7 [shape = 'u8[65536]{0}', space=vmem, size = 0x10000, scoped, tag = 'input window, operand 2, single buffered']
    #allocation8 [shape = 'u8[32768]{0}', space=vmem, size = 0x8000, scoped, tag = 'input window, operand 3, single buffered']
    #allocation9 [shape = 's32[1]{0}', space=sflag, size = 0x4, scoped, tag = 'scoped memory for tpu_custom_call.1']
    #allocation10 [shape = 'u8[32768]{0}', space=vmem, size = 0x8000, scoped, tag = 'input window, operand 6, single buffered']
    #allocation11 [shape = 'u8[4096]{0}', space=vmem, size = 0x1000, scoped, tag = 'output window, operand 0, single buffered']
    %13 = vsyncpa [#allocation3], 0
    %14 = vsyncpa [#allocation6], 0
    %15 = vsyncpa [#allocation9], 0
    %16 = vsyncpa [#allocation4], 0
    // Predicated region
    $region2: #{tpu_custom_call.1} parent=1 // pred_check
      _
    $region3: #{tpu_custom_call.1} parent=1 // pred_check_branch
      %18 = sbr.rel (0) target = $region5
    $region4: #{tpu_custom_call.1} parent=1 // pred_region
      %s20 = ssub.s32 768, 768
      %21 = vsyncadd [#allocation3], %s20
      %s22 = sshll.u32 [#allocation2], 4
      %s23 = int_to_ptr.vmem [resolvable:$true] %s22
      %28 = dma.hbm_to_vmem [thread:$0]  %s0, 768, %s23, [#allocation3], 128, 128, 8
    $region5: #{tpu_custom_call.1} parent=1 // pred_fallthru
      _
    // Predicated region
    $region6: #{tpu_custom_call.1} parent=1 // pred_check
      _
    $region7: #{tpu_custom_call.1} parent=1 // pred_check_branch
      %30 = sbr.rel (0) target = $region9
    $region8: #{tpu_custom_call.1} parent=1 // pred_region
      %s32 = ssub.s32 6144, 6144
      %33 = vsyncadd [#allocation6], %s32
      %s34 = sshll.u32 [#allocation5], 4
      %s35 = int_to_ptr.vmem [resolvable:$true] %s34
      %40 = dma.hbm_to_vmem [thread:$0]  %s1, 6144, %s35, [#allocation6], 192, 192, 12
    $region9: #{tpu_custom_call.1} parent=1 // pred_fallthru
      _
    // Predicated region
    $region10: #{tpu_custom_call.1} parent=1 // pred_check
      _
    $region11: #{tpu_custom_call.1} parent=1 // pred_check_branch
      %42 = sbr.rel (0) target = $region13
    $region12: #{tpu_custom_call.1} parent=1 // pred_region
      %s44 = ssub.s32 2048, 2048
      %45 = vsyncadd [#allocation6], %s44
      %s46 = sshll.u32 [#allocation7], 4
      %s47 = int_to_ptr.vmem [resolvable:$true] %s46
      %52 = dma.hbm_to_vmem [thread:$0]  %s2, 2048, %s47, [#allocation6], 128, 128, 8
    $region13: #{tpu_custom_call.1} parent=1 // pred_fallthru
      _
    // Predicated region
    $region14: #{tpu_custom_call.1} parent=1 // pred_check
      _
    $region15: #{tpu_custom_call.1} parent=1 // pred_check_branch
      %54 = sbr.rel (0) target = $region17
    $region16: #{tpu_custom_call.1} parent=1 // pred_region
      %s56 = ssub.s32 1024, 1024
      %57 = vsyncadd [#allocation9], %s56
      %s58 = sshll.u32 [#allocation8], 4
      %s59 = int_to_ptr.vmem [resolvable:$true] %s58
      %64 = dma.hbm_to_vmem [thread:$0]  %s3, 1024, %s59, [#allocation9], 64, 64, 4
    $region17: #{tpu_custom_call.1} parent=1 // pred_fallthru
      _
    // Predicated region
    $region18: #{tpu_custom_call.1} parent=1 // pred_check
      _
    $region19: #{tpu_custom_call.1} parent=1 // pred_check_branch
      %66 = sbr.rel (0) target = $region21
    $region20: #{tpu_custom_call.1} parent=1 // pred_region
      _
    $region21: #{tpu_custom_call.1} parent=1 // pred_fallthru
      _
    // Predicated region
    $region22: #{tpu_custom_call.1} parent=1 // pred_check
      _
    $region23: #{tpu_custom_call.1} parent=1 // pred_check_branch
      %68 = sbr.rel (0) target = $region25
    $region24: #{tpu_custom_call.1} parent=1 // pred_region
      _
    $region25: #{tpu_custom_call.1} parent=1 // pred_fallthru
      _
    // Predicated region
    $region26: #{tpu_custom_call.1} parent=1 // pred_check
      _
    $region27: #{tpu_custom_call.1} parent=1 // pred_check_branch
      %70 = sbr.rel (0) target = $region29
    $region28: #{tpu_custom_call.1} parent=1 // pred_region
      %s72 = ssub.s32 1024, 1024
      %73 = vsyncadd [#allocation9], %s72
      %s74 = sshll.u32 [#allocation10], 4
      %s75 = int_to_ptr.vmem [resolvable:$true] %s74
      %80 = dma.hbm_to_vmem [thread:$0]  %s6, 1024, %s75, [#allocation9], 64, 64, 4
    $region29: #{tpu_custom_call.1} parent=1 // pred_fallthru
      _
    // Predicated region
    $region30: #{tpu_custom_call.1} parent=1 // pred_check
      _
    $region31: #{tpu_custom_call.1} parent=1 // pred_check_branch
      %82 = sbr.rel (0) target = $region33
    $region32: #{tpu_custom_call.1} parent=1 // pred_region
      _
    $region33: #{tpu_custom_call.1} parent=1 // pred_fallthru
      _
    // Predicated region
    $region34: #{tpu_custom_call.1} parent=1 // pred_check
      _
    $region35: #{tpu_custom_call.1} parent=1 // pred_check_branch
      %84 = sbr.rel (0) target = $region37
    $region36: #{tpu_custom_call.1} parent=1 // pred_region
      %85 = dma.done [#allocation3], 768
    $region37: #{tpu_custom_call.1} parent=1 // pred_fallthru
      _
    // Predicated region
    $region38: #{tpu_custom_call.1} parent=1 // pred_check
      _
    $region39: #{tpu_custom_call.1} parent=1 // pred_check_branch
      %87 = sbr.rel (0) target = $region41
    $region40: #{tpu_custom_call.1} parent=1 // pred_region
      %88 = dma.done [#allocation6], 6144
    $region41: #{tpu_custom_call.1} parent=1 // pred_fallthru
      _
    // Predicated region
    $region42: #{tpu_custom_call.1} parent=1 // pred_check
      _
    $region43: #{tpu_custom_call.1} parent=1 // pred_check_branch
      %90 = sbr.rel (0) target = $region45
    $region44: #{tpu_custom_call.1} parent=1 // pred_region
      %91 = dma.done [#allocation6], 2048
    $region45: #{tpu_custom_call.1} parent=1 // pred_fallthru
      _
    // Predicated region
    $region46: #{tpu_custom_call.1} parent=1 // pred_check
      _
    $region47: #{tpu_custom_call.1} parent=1 // pred_check_branch
      %93 = sbr.rel (0) target = $region49
    $region48: #{tpu_custom_call.1} parent=1 // pred_region
      %94 = dma.done [#allocation9], 1024
    $region49: #{tpu_custom_call.1} parent=1 // pred_fallthru
      _
    // Predicated region
    $region50: #{tpu_custom_call.1} parent=1 // pred_check
      _
    $region51: #{tpu_custom_call.1} parent=1 // pred_check_branch
      %96 = sbr.rel (0) target = $region53
    $region52: #{tpu_custom_call.1} parent=1 // pred_region
      %97 = dma.done [#allocation9], 1024
    $region53: #{tpu_custom_call.1} parent=1 // pred_fallthru
      _
    %v99 = vld [vmem:[#allocation2] sm:$0xff]
    %v100 = vld [vmem:[#allocation2 + $0x8] sm:$0xff]
    %v101 = vld [vmem:[#allocation2 + $0x10] sm:$0xff]
    %v102 = vld [vmem:[#allocation2 + $0x18] sm:$0xff]
    %v103 = vld [vmem:[#allocation2 + $0x20] sm:$0xff]
    %v104 = vld [vmem:[#allocation2 + $0x28] sm:$0xff]
    %v105 = vld [vmem:[#allocation5] sm:$0xff]
    %v106 = vld [vmem:[#allocation5 + $0x8] sm:$0xf]
    %v107 = vld [vmem:[#allocation5 + $0xc] sm:$0xff]
    %v108 = vld [vmem:[#allocation5 + $0x14] sm:$0xf]
    %v109 = vld [vmem:[#allocation5 + $0x18] sm:$0xff]
    %v110 = vld [vmem:[#allocation5 + $0x20] sm:$0xf]
    %v111 = vld [vmem:[#allocation5 + $0x24] sm:$0xff]
    %v112 = vld [vmem:[#allocation5 + $0x2c] sm:$0xf]
    %v113 = vld [vmem:[#allocation5 + $0x30] sm:$0xff]
    %v114 = vld [vmem:[#allocation5 + $0x38] sm:$0xf]
    %v115 = vld [vmem:[#allocation5 + $0x3c] sm:$0xff]
    %v116 = vld [vmem:[#allocation5 + $0x44] sm:$0xf]
    %v117 = vld [vmem:[#allocation5 + $0x48] sm:$0xff]
    %v118 = vld [vmem:[#allocation5 + $0x50] sm:$0xf]
    %v119 = vld [vmem:[#allocation5 + $0x54] sm:$0xff]
    %v120 = vld [vmem:[#allocation5 + $0x5c] sm:$0xf]
    %v121 = vld [vmem:[#allocation5 + $0x60] sm:$0xff]
    %v122 = vld [vmem:[#allocation5 + $0x68] sm:$0xf]
    %v123 = vld [vmem:[#allocation5 + $0x6c] sm:$0xff]
    %v124 = vld [vmem:[#allocation5 + $0x74] sm:$0xf]
    %v125 = vld [vmem:[#allocation5 + $0x78] sm:$0xff]
    %v126 = vld [vmem:[#allocation5 + $0x80] sm:$0xf]
    %v127 = vld [vmem:[#allocation5 + $0x84] sm:$0xff]
    %v128 = vld [vmem:[#allocation5 + $0x8c] sm:$0xf]
    %v129 = vld [vmem:[#allocation5 + $0x90] sm:$0xff]
    %v130 = vld [vmem:[#allocation5 + $0x98] sm:$0xf]
    %v131 = vld [vmem:[#allocation5 + $0x9c] sm:$0xff]
    %v132 = vld [vmem:[#allocation5 + $0xa4] sm:$0xf]
    %v133 = vld [vmem:[#allocation5 + $0xa8] sm:$0xff]
    %v134 = vld [vmem:[#allocation5 + $0xb0] sm:$0xf]
    %v135 = vld [vmem:[#allocation5 + $0xb4] sm:$0xff]
    %v136 = vld [vmem:[#allocation5 + $0xbc] sm:$0xf]
    %v137 = vld [vmem:[#allocation5 + $0xc0] sm:$0xff]
    %v138 = vld [vmem:[#allocation5 + $0xc8] sm:$0xf]
    %v139 = vld [vmem:[#allocation5 + $0xcc] sm:$0xff]
    %v140 = vld [vmem:[#allocation5 + $0xd4] sm:$0xf]
    %v141 = vld [vmem:[#allocation5 + $0xd8] sm:$0xff]
    %v142 = vld [vmem:[#allocation5 + $0xe0] sm:$0xf]
    %v143 = vld [vmem:[#allocation5 + $0xe4] sm:$0xff]
    %v144 = vld [vmem:[#allocation5 + $0xec] sm:$0xf]
    %v145 = vld [vmem:[#allocation5 + $0xf0] sm:$0xff]
    %v146 = vld [vmem:[#allocation5 + $0xf8] sm:$0xf]
    %v147 = vld [vmem:[#allocation5 + $0xfc] sm:$0xff]
    %v148 = vld [vmem:[#allocation5 + $0x104] sm:$0xf]
    %v149 = vld [vmem:[#allocation5 + $0x108] sm:$0xff]
    %v150 = vld [vmem:[#allocation5 + $0x110] sm:$0xf]
    %v151 = vld [vmem:[#allocation5 + $0x114] sm:$0xff]
    %v152 = vld [vmem:[#allocation5 + $0x11c] sm:$0xf]
    %v153 = vld [vmem:[#allocation5 + $0x120] sm:$0xff]
    %v154 = vld [vmem:[#allocation5 + $0x128] sm:$0xf]
    %v155 = vld [vmem:[#allocation5 + $0x12c] sm:$0xff]
    %v156 = vld [vmem:[#allocation5 + $0x134] sm:$0xf]
    %v157 = vld [vmem:[#allocation5 + $0x138] sm:$0xff]
    %v158 = vld [vmem:[#allocation5 + $0x140] sm:$0xf]
    %v159 = vld [vmem:[#allocation5 + $0x144] sm:$0xff]
    %v160 = vld [vmem:[#allocation5 + $0x14c] sm:$0xf]
    %v161 = vld [vmem:[#allocation5 + $0x150] sm:$0xff]
    %v162 = vld [vmem:[#allocation5 + $0x158] sm:$0xf]
    %v163 = vld [vmem:[#allocation5 + $0x15c] sm:$0xff]
    %v164 = vld [vmem:[#allocation5 + $0x164] sm:$0xf]
    %v165 = vld [vmem:[#allocation5 + $0x168] sm:$0xff]
    %v166 = vld [vmem:[#allocation5 + $0x170] sm:$0xf]
    %v167 = vld [vmem:[#allocation5 + $0x174] sm:$0xff]
    %v168 = vld [vmem:[#allocation5 + $0x17c] sm:$0xf]
    %v169 = vld [vmem:[%s4] sm:$0x7]
    %v171 = vlaneseq
    %v172 = vshrl.u32 %v171, 7
    %v173 = vsub.s32 0, %v172
    %v174 = vrot.slane %v169, %v173
    %v175 = vlaneseq
    %v176 = vshrl.u32 %v175, 7
    %v177 = vsub.s32 1, %v176
    %v178 = vrot.slane %v169, %v177
    %v179 = vlaneseq
    %v180 = vshrl.u32 %v179, 7
    %v181 = vsub.s32 2, %v180
    %v182 = vrot.slane %v169, %v181
    %v192 = vunpack.c.l.b16 %v99
    %v193 = vunpack.c.h.b16 %v99
    %v194 = vunpack.c.l.b16 %v100
    %v195 = vunpack.c.h.b16 %v100
    %v196 = vunpack.c.l.b16 %v101
    %v197 = vunpack.c.h.b16 %v101
    %v198 = vunpack.c.l.b16 %v102
    %v199 = vunpack.c.h.b16 %v102
    %v200 = vunpack.c.l.b16 %v103
    %v201 = vunpack.c.h.b16 %v103
    %v202 = vunpack.c.l.b16 %v104
    %v203 = vunpack.c.h.b16 %v104
    %v204 = vpack.c.b16 %v194, %v192
    %v205 = vpack.c.b16 %v195, %v193
    %v206 = vpack.c.b16 %v198, %v196
    %v207 = vpack.c.b16 %v199, %v197
    %v208 = vpack.c.b16 %v202, %v200
    %v209 = vpack.c.b16 %v203, %v201
    %v280 = vunpack.c.l.b16 %v105
    %v281 = vunpack.c.h.b16 %v105
    %v282 = vunpack.c.l.b16 %v106
    %v283 = vunpack.c.l.b16 %v107
    %v284 = vunpack.c.h.b16 %v107
    %v285 = vunpack.c.l.b16 %v108
    %v286 = vunpack.c.l.b16 %v109
    %v287 = vunpack.c.h.b16 %v109
    %v288 = vunpack.c.l.b16 %v110
    %v289 = vunpack.c.l.b16 %v111
    %v290 = vunpack.c.h.b16 %v111
    %v291 = vunpack.c.l.b16 %v112
    %v292 = vunpack.c.l.b16 %v113
    %v293 = vunpack.c.h.b16 %v113
    %v294 = vunpack.c.l.b16 %v114
    %v295 = vunpack.c.l.b16 %v115
    %v296 = vunpack.c.h.b16 %v115
    %v297 = vunpack.c.l.b16 %v116
    %v298 = vunpack.c.l.b16 %v117
    %v299 = vunpack.c.h.b16 %v117
    %v300 = vunpack.c.l.b16 %v118
    %v301 = vunpack.c.l.b16 %v119
    %v302 = vunpack.c.h.b16 %v119
    %v303 = vunpack.c.l.b16 %v120
    %v304 = vunpack.c.l.b16 %v121
    %v305 = vunpack.c.h.b16 %v121
    %v306 = vunpack.c.l.b16 %v122
    %v307 = vunpack.c.l.b16 %v123
    %v308 = vunpack.c.h.b16 %v123
    %v309 = vunpack.c.l.b16 %v124
    %v310 = vunpack.c.l.b16 %v125
    %v311 = vunpack.c.h.b16 %v125
    %v312 = vunpack.c.l.b16 %v126
    %v313 = vunpack.c.l.b16 %v127
    %v314 = vunpack.c.h.b16 %v127
    %v315 = vunpack.c.l.b16 %v128
    %v316 = vunpack.c.l.b16 %v129
    %v317 = vunpack.c.h.b16 %v129
    %v318 = vunpack.c.l.b16 %v130
    %v319 = vunpack.c.l.b16 %v131
    %v320 = vunpack.c.h.b16 %v131
    %v321 = vunpack.c.l.b16 %v132
    %v322 = vunpack.c.l.b16 %v133
    %v323 = vunpack.c.h.b16 %v133
    %v324 = vunpack.c.l.b16 %v134
    %v325 = vunpack.c.l.b16 %v135
    %v326 = vunpack.c.h.b16 %v135
    %v327 = vunpack.c.l.b16 %v136
    %v328 = vunpack.c.l.b16 %v137
    %v329 = vunpack.c.h.b16 %v137
    %v330 = vunpack.c.l.b16 %v138
    %v331 = vunpack.c.l.b16 %v139
    %v332 = vunpack.c.h.b16 %v139
    %v333 = vunpack.c.l.b16 %v140
    %v334 = vunpack.c.l.b16 %v141
    %v335 = vunpack.c.h.b16 %v141
    %v336 = vunpack.c.l.b16 %v142
    %v337 = vunpack.c.l.b16 %v143
    %v338 = vunpack.c.h.b16 %v143
    %v339 = vunpack.c.l.b16 %v144
    %v340 = vunpack.c.l.b16 %v145
    %v341 = vunpack.c.h.b16 %v145
    %v342 = vunpack.c.l.b16 %v146
    %v343 = vunpack.c.l.b16 %v147
    %v344 = vunpack.c.h.b16 %v147
    %v345 = vunpack.c.l.b16 %v148
    %v346 = vunpack.c.l.b16 %v149
    %v347 = vunpack.c.h.b16 %v149
    %v348 = vunpack.c.l.b16 %v150
    %v349 = vunpack.c.l.b16 %v151
    %v350 = vunpack.c.h.b16 %v151
    %v351 = vunpack.c.l.b16 %v152
    %v352 = vunpack.c.l.b16 %v153
    %v353 = vunpack.c.h.b16 %v153
    %v354 = vunpack.c.l.b16 %v154
    %v355 = vunpack.c.l.b16 %v155
    %v356 = vunpack.c.h.b16 %v155
    %v357 = vunpack.c.l.b16 %v156
    %v358 = vunpack.c.l.b16 %v157
    %v359 = vunpack.c.h.b16 %v157
    %v360 = vunpack.c.l.b16 %v158
    %v361 = vunpack.c.l.b16 %v159
    %v362 = vunpack.c.h.b16 %v159
    %v363 = vunpack.c.l.b16 %v160
    %v364 = vunpack.c.l.b16 %v161
    %v365 = vunpack.c.h.b16 %v161
    %v366 = vunpack.c.l.b16 %v162
    %v367 = vunpack.c.l.b16 %v163
    %v368 = vunpack.c.h.b16 %v163
    %v369 = vunpack.c.l.b16 %v164
    %v370 = vunpack.c.l.b16 %v165
    %v371 = vunpack.c.h.b16 %v165
    %v372 = vunpack.c.l.b16 %v166
    %v373 = vunpack.c.l.b16 %v167
    %v374 = vunpack.c.h.b16 %v167
    %v375 = vunpack.c.l.b16 %v168
    %v376 = vpack.c.b16 %v283, %v280
    %v377 = vpack.c.b16 %v284, %v281
    %v378 = vpack.c.b16 %v285, %v282
    %v379 = vpack.c.b16 %v289, %v286
    %v380 = vpack.c.b16 %v290, %v287
    %v381 = vpack.c.b16 %v291, %v288
    %v382 = vpack.c.b16 %v295, %v292
    %v383 = vpack.c.b16 %v296, %v293
    %v384 = vpack.c.b16 %v297, %v294
    %v385 = vpack.c.b16 %v301, %v298
    %v386 = vpack.c.b16 %v302, %v299
    %v387 = vpack.c.b16 %v303, %v300
    %v388 = vpack.c.b16 %v307, %v304
    %v389 = vpack.c.b16 %v308, %v305
    %v390 = vpack.c.b16 %v309, %v306
    %v391 = vpack.c.b16 %v313, %v310
    %v392 = vpack.c.b16 %v314, %v311
    %v393 = vpack.c.b16 %v315, %v312
    %v394 = vpack.c.b16 %v319, %v316
    %v395 = vpack.c.b16 %v320, %v317
    %v396 = vpack.c.b16 %v321, %v318
    %v397 = vpack.c.b16 %v325, %v322
    %v398 = vpack.c.b16 %v326, %v323
    %v399 = vpack.c.b16 %v327, %v324
    %v400 = vpack.c.b16 %v331, %v328
    %v401 = vpack.c.b16 %v332, %v329
    %v402 = vpack.c.b16 %v333, %v330
    %v403 = vpack.c.b16 %v337, %v334
    %v404 = vpack.c.b16 %v338, %v335
    %v405 = vpack.c.b16 %v339, %v336
    %v406 = vpack.c.b16 %v343, %v340
    %v407 = vpack.c.b16 %v344, %v341
    %v408 = vpack.c.b16 %v345, %v342
    %v409 = vpack.c.b16 %v349, %v346
    %v410 = vpack.c.b16 %v350, %v347
    %v411 = vpack.c.b16 %v351, %v348
    %v412 = vpack.c.b16 %v355, %v352
    %v413 = vpack.c.b16 %v356, %v353
    %v414 = vpack.c.b16 %v357, %v354
    %v415 = vpack.c.b16 %v361, %v358
    %v416 = vpack.c.b16 %v362, %v359
    %v417 = vpack.c.b16 %v363, %v360
    %v418 = vpack.c.b16 %v367, %v364
    %v419 = vpack.c.b16 %v368, %v365
    %v420 = vpack.c.b16 %v369, %v366
    %v421 = vpack.c.b16 %v373, %v370
    %v422 = vpack.c.b16 %v374, %v371
    %v423 = vpack.c.b16 %v375, %v372
    %472 = vmatprep.subr.bf16.mxu0 %v377
    %473 = vmatpush1.bf16.msra.mxu0 %v376
    %474 = vmatprep.subr.bf16.mxu0 %v380
    %475 = vmatpush1.bf16.msra.mxu0 %v379
    %476 = vmatprep.subr.bf16.mxu0 %v383
    %477 = vmatpush1.bf16.msra.mxu0 %v382
    %478 = vmatprep.subr.bf16.mxu0 %v386
    %479 = vmatpush1.bf16.msra.mxu0 %v385
    %480 = vmatprep.subr.bf16.mxu0 %v389
    %481 = vmatpush1.bf16.msra.mxu0 %v388
    %482 = vmatprep.subr.bf16.mxu0 %v392
    %483 = vmatpush1.bf16.msra.mxu0 %v391
    %484 = vmatprep.subr.bf16.mxu0 %v395
    %485 = vmatpush1.bf16.msra.mxu0 %v394
    %486 = vmatprep.subr.bf16.mxu0 %v398
    %487 = vmatpush1.bf16.msra.mxu0 %v397
    %488 = vmatprep.subr.bf16.mxu0 %v401
    %489 = vmatpush1.bf16.msra.mxu0 %v400
    %490 = vmatprep.subr.bf16.mxu0 %v404
    %491 = vmatpush1.bf16.msra.mxu0 %v403
    %492 = vmatprep.subr.bf16.mxu0 %v407
    %493 = vmatpush1.bf16.msra.mxu0 %v406
    %494 = vmatprep.subr.bf16.mxu0 %v410
    %495 = vmatpush1.bf16.msra.mxu0 %v409
    %496 = vmatprep.subr.bf16.mxu0 %v413
    %497 = vmatpush1.bf16.msra.mxu0 %v412
    %498 = vmatprep.subr.bf16.mxu0 %v416
    %499 = vmatpush1.bf16.msra.mxu0 %v415
    %500 = vmatprep.subr.bf16.mxu0 %v419
    %501 = vmatpush1.bf16.msra.mxu0 %v418
    %502 = vmatprep.subr.bf16.mxu0 %v422
    %503 = vmatpush1.bf16.msra.mxu0 %v421
    %504 = vmatprep.mubr.bf16.mxu0 %v205
    %505 = vmatmul.mubr.bf16.gmra.mrb[0].mxu0 %v204
    %v506 = vpop.f32.mrb[0].mxu0
    %v507 = vadd.f32 %v174, %v506
    %v508 = vpop.f32.mrb[0].mxu0
    %v509 = vadd.f32 %v178, %v508
    %v510 = vpop.f32.mrb[0].mxu0
    %v511 = vadd.f32 %v174, %v510
    %v512 = vpop.f32.mrb[0].mxu0
    %v513 = vadd.f32 %v178, %v512
    %514 = vmatprep.mubr.bf16.mxu0 %v207
    %515 = vmatmul.mubr.bf16.gmra.mrb[0].mxu0 %v206
    %v516 = vpop.f32.mrb[0].mxu0
    %v517 = vadd.f32 %v174, %v516
    %v518 = vpop.f32.mrb[0].mxu0
    %v519 = vadd.f32 %v178, %v518
    %v520 = vpop.f32.mrb[0].mxu0
    %v521 = vadd.f32 %v174, %v520
    %v522 = vpop.f32.mrb[0].mxu0
    %v523 = vadd.f32 %v178, %v522
    %524 = vmatprep.mubr.bf16.mxu0 %v209
    %525 = vmatmul.mubr.bf16.gmra.mrb[0].mxu0 %v208
    %v526 = vpop.f32.mrb[0].mxu0
    %v527 = vadd.f32 %v174, %v526
    %v528 = vpop.f32.mrb[0].mxu0
    %v529 = vadd.f32 %v178, %v528
    %v530 = vpop.f32.mrb[0].mxu0
    %v531 = vadd.f32 %v174, %v530
    %v532 = vpop.f32.mrb[0].mxu0
    %v533 = vadd.f32 %v178, %v532
    %534 = vdwg.mxu0
    %535 = vmatprep.subr.bf16.mxu0 0
    %536 = vmatpush1.bf16.msra.mxu0 %v378
    %537 = vmatprep.subr.bf16.mxu0 0
    %538 = vmatpush1.bf16.msra.mxu0 %v381
    %539 = vmatprep.subr.bf16.mxu0 0
    %540 = vmatpush1.bf16.msra.mxu0 %v384
    %541 = vmatprep.subr.bf16.mxu0 0
    %542 = vmatpush1.bf16.msra.mxu0 %v387
    %543 = vmatprep.subr.bf16.mxu0 0
    %544 = vmatpush1.bf16.msra.mxu0 %v390
    %545 = vmatprep.subr.bf16.mxu0 0
    %546 = vmatpush1.bf16.msra.mxu0 %v393
    %547 = vmatprep.subr.bf16.mxu0 0
    %548 = vmatpush1.bf16.msra.mxu0 %v396
    %549 = vmatprep.subr.bf16.mxu0 0
    %550 = vmatpush1.bf16.msra.mxu0 %v399
    %551 = vmatprep.subr.bf16.mxu0 0
    %552 = vmatpush1.bf16.msra.mxu0 %v402
    %553 = vmatprep.subr.bf16.mxu0 0
    %554 = vmatpush1.bf16.msra.mxu0 %v405
    %555 = vmatprep.subr.bf16.mxu0 0
    %556 = vmatpush1.bf16.msra.mxu0 %v408
    %557 = vmatprep.subr.bf16.mxu0 0
    %558 = vmatpush1.bf16.msra.mxu0 %v411
    %559 = vmatprep.subr.bf16.mxu0 0
    %560 = vmatpush1.bf16.msra.mxu0 %v414
    %561 = vmatprep.subr.bf16.mxu0 0
    %562 = vmatpush1.bf16.msra.mxu0 %v417
    %563 = vmatprep.subr.bf16.mxu0 0
    %564 = vmatpush1.bf16.msra.mxu0 %v420
    %565 = vmatprep.subr.bf16.mxu0 0
    %566 = vmatpush1.bf16.msra.mxu0 %v423
    %567 = vmatprep.mubr.bf16.mxu0 %v205
    %568 = vmatmul.mubr.bf16.gmra.mrb[0].mxu0 %v204
    %v569 = vpop.f32.mrb[0].mxu0
    %v570 = vadd.f32 %v182, %v569
    %v571 = vpop.f32.mrb[0].mxu0
    %v572 = vpop.f32.mrb[0].mxu0
    %v573 = vadd.f32 %v182, %v572
    %v574 = vpop.f32.mrb[0].mxu0
    %575 = vmatprep.mubr.bf16.mxu0 %v207
    %576 = vmatmul.mubr.bf16.gmra.mrb[0].mxu0 %v206
    %v577 = vpop.f32.mrb[0].mxu0
    %v578 = vadd.f32 %v182, %v577
    %v579 = vpop.f32.mrb[0].mxu0
    %v580 = vpop.f32.mrb[0].mxu0
    %v581 = vadd.f32 %v182, %v580
    %v582 = vpop.f32.mrb[0].mxu0
    %583 = vmatprep.mubr.bf16.mxu0 %v209
    %584 = vmatmul.mubr.bf16.gmra.mrb[0].mxu0 %v208
    %v585 = vpop.f32.mrb[0].mxu0
    %v586 = vadd.f32 %v182, %v585
    %v587 = vpop.f32.mrb[0].mxu0
    %v588 = vpop.f32.mrb[0].mxu0
    %v589 = vadd.f32 %v182, %v588
    %v590 = vpop.f32.mrb[0].mxu0
    %591 = vdwg.mxu0
    %v592 = vld [vmem:[%s5] sm:$0x1]
    %v594 = vlaneseq
    %v595 = vshrl.u32 %v594, 7
    %v596 = vsub.s32 0, %v595
    %v597 = vrot.slane %v592, %v596
    %v599 = vxor.u32 %v507, 2147483648
    %v600 = vmul.f32 %v599, 1.442695
    %v601 = vpow.pop %v600
    %v602 = vadd.f32 %v601, 1.0
    %v603 = vrcp.pop %v602
    %v604 = vmul.f32 1.0, %v603
    %v605 = vxor.u32 %v509, 2147483648
    %v606 = vmul.f32 %v605, 1.442695
    %v607 = vpow.pop %v606
    %v608 = vadd.f32 %v607, 1.0
    %v609 = vrcp.pop %v608
    %v610 = vmul.f32 1.0, %v609
    %v611 = vmul.f32 %v604, %v597
    %v612 = vadd.f32 %v570, %v611
    %v613 = vtanh.pop %v612
    %v614 = vsub.f32 1.0, %v610
    %v615 = vmul.f32 %v614, %v613
    %v616 = vpack.c.bf16 %v615, %v615
    %v617 = vld [vmem:[#allocation7] sm:$0xff]
    %v618 = vld [vmem:[#allocation7 + $0x8] sm:$0xff]
    %v619 = vld [vmem:[#allocation7 + $0x10] sm:$0xff]
    %v620 = vld [vmem:[#allocation7 + $0x18] sm:$0xff]
    %v621 = vld [vmem:[#allocation7 + $0x20] sm:$0xff]
    %v622 = vld [vmem:[#allocation7 + $0x28] sm:$0xff]
    %v623 = vld [vmem:[#allocation7 + $0x30] sm:$0xff]
    %v624 = vld [vmem:[#allocation7 + $0x38] sm:$0xff]
    %v625 = vld [vmem:[#allocation7 + $0x40] sm:$0xff]
    %v626 = vld [vmem:[#allocation7 + $0x48] sm:$0xff]
    %v627 = vld [vmem:[#allocation7 + $0x50] sm:$0xff]
    %v628 = vld [vmem:[#allocation7 + $0x58] sm:$0xff]
    %v629 = vld [vmem:[#allocation7 + $0x60] sm:$0xff]
    %v630 = vld [vmem:[#allocation7 + $0x68] sm:$0xff]
    %v631 = vld [vmem:[#allocation7 + $0x70] sm:$0xff]
    %v632 = vld [vmem:[#allocation7 + $0x78] sm:$0xff]
    %v649 = vunpack.c.l.b16 %v617
    %v650 = vunpack.c.h.b16 %v617
    %v651 = vunpack.c.l.b16 %v618
    %v652 = vunpack.c.h.b16 %v618
    %v653 = vunpack.c.l.b16 %v619
    %v654 = vunpack.c.h.b16 %v619
    %v655 = vunpack.c.l.b16 %v620
    %v656 = vunpack.c.h.b16 %v620
    %v657 = vunpack.c.l.b16 %v621
    %v658 = vunpack.c.h.b16 %v621
    %v659 = vunpack.c.l.b16 %v622
    %v660 = vunpack.c.h.b16 %v622
    %v661 = vunpack.c.l.b16 %v623
    %v662 = vunpack.c.h.b16 %v623
    %v663 = vunpack.c.l.b16 %v624
    %v664 = vunpack.c.h.b16 %v624
    %v665 = vunpack.c.l.b16 %v625
    %v666 = vunpack.c.h.b16 %v625
    %v667 = vunpack.c.l.b16 %v626
    %v668 = vunpack.c.h.b16 %v626
    %v669 = vunpack.c.l.b16 %v627
    %v670 = vunpack.c.h.b16 %v627
    %v671 = vunpack.c.l.b16 %v628
    %v672 = vunpack.c.h.b16 %v628
    %v673 = vunpack.c.l.b16 %v629
    %v674 = vunpack.c.h.b16 %v629
    %v675 = vunpack.c.l.b16 %v630
    %v676 = vunpack.c.h.b16 %v630
    %v677 = vunpack.c.l.b16 %v631
    %v678 = vunpack.c.h.b16 %v631
    %v679 = vunpack.c.l.b16 %v632
    %v680 = vunpack.c.h.b16 %v632
    %v681 = vpack.c.b16 %v651, %v649
    %v682 = vpack.c.b16 %v652, %v650
    %v683 = vpack.c.b16 %v655, %v653
    %v684 = vpack.c.b16 %v656, %v654
    %v685 = vpack.c.b16 %v659, %v657
    %v686 = vpack.c.b16 %v660, %v658
    %v687 = vpack.c.b16 %v663, %v661
    %v688 = vpack.c.b16 %v664, %v662
    %v689 = vpack.c.b16 %v667, %v665
    %v690 = vpack.c.b16 %v668, %v666
    %v691 = vpack.c.b16 %v671, %v669
    %v692 = vpack.c.b16 %v672, %v670
    %v693 = vpack.c.b16 %v675, %v673
    %v694 = vpack.c.b16 %v676, %v674
    %v695 = vpack.c.b16 %v679, %v677
    %v696 = vpack.c.b16 %v680, %v678
    %713 = vmatprep.subr.bf16.mxu0 %v682
    %714 = vmatpush1.bf16.msra.mxu0 %v681
    %715 = vmatprep.subr.bf16.mxu0 %v684
    %716 = vmatpush1.bf16.msra.mxu0 %v683
    %717 = vmatprep.subr.bf16.mxu0 %v686
    %718 = vmatpush1.bf16.msra.mxu0 %v685
    %719 = vmatprep.subr.bf16.mxu0 %v688
    %720 = vmatpush1.bf16.msra.mxu0 %v687
    %721 = vmatprep.subr.bf16.mxu0 %v690
    %722 = vmatpush1.bf16.msra.mxu0 %v689
    %723 = vmatprep.subr.bf16.mxu0 %v692
    %724 = vmatpush1.bf16.msra.mxu0 %v691
    %725 = vmatprep.subr.bf16.mxu0 %v694
    %726 = vmatpush1.bf16.msra.mxu0 %v693
    %727 = vmatprep.subr.bf16.mxu0 %v696
    %728 = vmatpush1.bf16.msra.mxu0 %v695
    %729 = vmatprep.subr.bf16.mxu0 0
    %730 = vmatpush1.bf16.msra.mxu0 0
    %731 = vmatprep.subr.bf16.mxu0 0
    %732 = vmatpush1.bf16.msra.mxu0 0
    %733 = vmatprep.subr.bf16.mxu0 0
    %734 = vmatpush1.bf16.msra.mxu0 0
    %735 = vmatprep.subr.bf16.mxu0 0
    %736 = vmatpush1.bf16.msra.mxu0 0
    %737 = vmatprep.subr.bf16.mxu0 0
    %738 = vmatpush1.bf16.msra.mxu0 0
    %739 = vmatprep.subr.bf16.mxu0 0
    %740 = vmatpush1.bf16.msra.mxu0 0
    %741 = vmatprep.subr.bf16.mxu0 0
    %742 = vmatpush1.bf16.msra.mxu0 0
    %743 = vmatprep.subr.bf16.mxu0 0
    %744 = vmatpush1.bf16.msra.mxu0 0
    %745 = vmatprep.mubr.bf16.mxu0 0
    %746 = vmatmul.mubr.bf16.gmra.mrb[0].mxu0 %v616
    %v747 = vpop.f32.mrb[0].mxu0
    %v748 = vadd.f32 0.0, %v747
    %v749 = vpop.f32.mrb[0].mxu0
    %v750 = vadd.f32 0.0, %v749
    %v751 = vpop.f32.mrb[0].mxu0
    %v752 = vpop.f32.mrb[0].mxu0
    %753 = vdwg.mxu0
    %v754 = vadd.f32 %v511, %v748
    %v755 = vxor.u32 %v754, 2147483648
    %v756 = vmul.f32 %v755, 1.442695
    %v757 = vpow.pop %v756
    %v758 = vadd.f32 %v757, 1.0
    %v759 = vrcp.pop %v758
    %v760 = vmul.f32 1.0, %v759
    %v761 = vadd.f32 %v513, %v750
    %v762 = vxor.u32 %v761, 2147483648
    %v763 = vmul.f32 %v762, 1.442695
    %v764 = vpow.pop %v763
    %v765 = vadd.f32 %v764, 1.0
    %v766 = vrcp.pop %v765
    %v767 = vmul.f32 1.0, %v766
    %v768 = vld [vmem:[#allocation8] sm:$0xf]
    %v769 = vld [vmem:[#allocation8 + $0x4] sm:$0xf]
    %v770 = vld [vmem:[#allocation8 + $0x8] sm:$0xf]
    %v771 = vld [vmem:[#allocation8 + $0xc] sm:$0xf]
    %v772 = vld [vmem:[#allocation8 + $0x10] sm:$0xf]
    %v773 = vld [vmem:[#allocation8 + $0x14] sm:$0xf]
    %v774 = vld [vmem:[#allocation8 + $0x18] sm:$0xf]
    %v775 = vld [vmem:[#allocation8 + $0x1c] sm:$0xf]
    %v776 = vld [vmem:[#allocation8 + $0x20] sm:$0xf]
    %v777 = vld [vmem:[#allocation8 + $0x24] sm:$0xf]
    %v778 = vld [vmem:[#allocation8 + $0x28] sm:$0xf]
    %v779 = vld [vmem:[#allocation8 + $0x2c] sm:$0xf]
    %v780 = vld [vmem:[#allocation8 + $0x30] sm:$0xf]
    %v781 = vld [vmem:[#allocation8 + $0x34] sm:$0xf]
    %v782 = vld [vmem:[#allocation8 + $0x38] sm:$0xf]
    %v783 = vld [vmem:[#allocation8 + $0x3c] sm:$0xf]
    %v800 = vunpack.c.l.b16 %v768
    %v801 = vunpack.c.l.b16 %v769
    %v802 = vunpack.c.l.b16 %v770
    %v803 = vunpack.c.l.b16 %v771
    %v804 = vunpack.c.l.b16 %v772
    %v805 = vunpack.c.l.b16 %v773
    %v806 = vunpack.c.l.b16 %v774
    %v807 = vunpack.c.l.b16 %v775
    %v808 = vunpack.c.l.b16 %v776
    %v809 = vunpack.c.l.b16 %v777
    %v810 = vunpack.c.l.b16 %v778
    %v811 = vunpack.c.l.b16 %v779
    %v812 = vunpack.c.l.b16 %v780
    %v813 = vunpack.c.l.b16 %v781
    %v814 = vunpack.c.l.b16 %v782
    %v815 = vunpack.c.l.b16 %v783
    %v816 = vpack.c.b16 %v801, %v800
    %v817 = vpack.c.b16 %v803, %v802
    %v818 = vpack.c.b16 %v805, %v804
    %v819 = vpack.c.b16 %v807, %v806
    %v820 = vpack.c.b16 %v809, %v808
    %v821 = vpack.c.b16 %v811, %v810
    %v822 = vpack.c.b16 %v813, %v812
    %v823 = vpack.c.b16 %v815, %v814
    %832 = vmatprep.subr.bf16.mxu0 0
    %833 = vmatpush1.bf16.msra.mxu0 %v816
    %834 = vmatprep.subr.bf16.mxu0 0
    %835 = vmatpush1.bf16.msra.mxu0 %v817
    %836 = vmatprep.subr.bf16.mxu0 0
    %837 = vmatpush1.bf16.msra.mxu0 %v818
    %838 = vmatprep.subr.bf16.mxu0 0
    %839 = vmatpush1.bf16.msra.mxu0 %v819
    %840 = vmatprep.subr.bf16.mxu0 0
    %841 = vmatpush1.bf16.msra.mxu0 %v820
    %842 = vmatprep.subr.bf16.mxu0 0
    %843 = vmatpush1.bf16.msra.mxu0 %v821
    %844 = vmatprep.subr.bf16.mxu0 0
    %845 = vmatpush1.bf16.msra.mxu0 %v822
    %846 = vmatprep.subr.bf16.mxu0 0
    %847 = vmatpush1.bf16.msra.mxu0 %v823
    %848 = vmatprep.subr.bf16.mxu0 0
    %849 = vmatpush1.bf16.msra.mxu0 0
    %850 = vmatprep.subr.bf16.mxu0 0
    %851 = vmatpush1.bf16.msra.mxu0 0
    %852 = vmatprep.subr.bf16.mxu0 0
    %853 = vmatpush1.bf16.msra.mxu0 0
    %854 = vmatprep.subr.bf16.mxu0 0
    %855 = vmatpush1.bf16.msra.mxu0 0
    %856 = vmatprep.subr.bf16.mxu0 0
    %857 = vmatpush1.bf16.msra.mxu0 0
    %858 = vmatprep.subr.bf16.mxu0 0
    %859 = vmatpush1.bf16.msra.mxu0 0
    %860 = vmatprep.subr.bf16.mxu0 0
    %861 = vmatpush1.bf16.msra.mxu0 0
    %862 = vmatprep.subr.bf16.mxu0 0
    %863 = vmatpush1.bf16.msra.mxu0 0
    %864 = vmatprep.mubr.bf16.mxu0 0
    %865 = vmatmul.mubr.bf16.gmra.mrb[0].mxu0 %v616
    %v866 = vpop.f32.mrb[0].mxu0
    %v867 = vadd.f32 %v597, %v866
    %v868 = vpop.f32.mrb[0].mxu0
    %v869 = vpop.f32.mrb[0].mxu0
    %v870 = vpop.f32.mrb[0].mxu0
    %871 = vdwg.mxu0
    %v872 = vmul.f32 %v760, %v867
    %v873 = vadd.f32 %v573, %v872
    %v874 = vtanh.pop %v873
    %v875 = vsub.f32 1.0, %v767
    %v876 = vmul.f32 %v875, %v874
    %v877 = vmul.f32 %v767, %v615
    %v878 = vadd.f32 %v876, %v877
    %v879 = vpack.c.bf16 %v878, %v878
    %880 = vmatprep.subr.bf16.mxu0 %v682
    %881 = vmatpush1.bf16.msra.mxu0 %v681
    %882 = vmatprep.subr.bf16.mxu0 %v684
    %883 = vmatpush1.bf16.msra.mxu0 %v683
    %884 = vmatprep.subr.bf16.mxu0 %v686
    %885 = vmatpush1.bf16.msra.mxu0 %v685
    %886 = vmatprep.subr.bf16.mxu0 %v688
    %887 = vmatpush1.bf16.msra.mxu0 %v687
    %888 = vmatprep.subr.bf16.mxu0 %v690
    %889 = vmatpush1.bf16.msra.mxu0 %v689
    %890 = vmatprep.subr.bf16.mxu0 %v692
    %891 = vmatpush1.bf16.msra.mxu0 %v691
    %892 = vmatprep.subr.bf16.mxu0 %v694
    %893 = vmatpush1.bf16.msra.mxu0 %v693
    %894 = vmatprep.subr.bf16.mxu0 %v696
    %895 = vmatpush1.bf16.msra.mxu0 %v695
    %896 = vmatprep.subr.bf16.mxu0 0
    %897 = vmatpush1.bf16.msra.mxu0 0
    %898 = vmatprep.subr.bf16.mxu0 0
    %899 = vmatpush1.bf16.msra.mxu0 0
    %900 = vmatprep.subr.bf16.mxu0 0
    %901 = vmatpush1.bf16.msra.mxu0 0
    %902 = vmatprep.subr.bf16.mxu0 0
    %903 = vmatpush1.bf16.msra.mxu0 0
    %904 = vmatprep.subr.bf16.mxu0 0
    %905 = vmatpush1.bf16.msra.mxu0 0
    %906 = vmatprep.subr.bf16.mxu0 0
    %907 = vmatpush1.bf16.msra.mxu0 0
    %908 = vmatprep.subr.bf16.mxu0 0
    %909 = vmatpush1.bf16.msra.mxu0 0
    %910 = vmatprep.subr.bf16.mxu0 0
    %911 = vmatpush1.bf16.msra.mxu0 0
    %912 = vmatprep.mubr.bf16.mxu0 0
    %913 = vmatmul.mubr.bf16.gmra.mrb[0].mxu0 %v879
    %v914 = vpop.f32.mrb[0].mxu0
    %v915 = vadd.f32 0.0, %v914
    %v916 = vpop.f32.mrb[0].mxu0
    %v917 = vadd.f32 0.0, %v916
    %v918 = vpop.f32.mrb[0].mxu0
    %v919 = vpop.f32.mrb[0].mxu0
    %920 = vdwg.mxu0
    %v921 = vadd.f32 %v517, %v915
    %v922 = vxor.u32 %v921, 2147483648
    %v923 = vmul.f32 %v922, 1.442695
    %v924 = vpow.pop %v923
    %v925 = vadd.f32 %v924, 1.0
    %v926 = vrcp.pop %v925
    %v927 = vmul.f32 1.0, %v926
    %v928 = vadd.f32 %v519, %v917
    %v929 = vxor.u32 %v928, 2147483648
    %v930 = vmul.f32 %v929, 1.442695
    %v931 = vpow.pop %v930
    %v932 = vadd.f32 %v931, 1.0
    %v933 = vrcp.pop %v932
    %v934 = vmul.f32 1.0, %v933
    %935 = vmatprep.subr.bf16.mxu0 0
    %936 = vmatpush1.bf16.msra.mxu0 %v816
    %937 = vmatprep.subr.bf16.mxu0 0
    %938 = vmatpush1.bf16.msra.mxu0 %v817
    %939 = vmatprep.subr.bf16.mxu0 0
    %940 = vmatpush1.bf16.msra.mxu0 %v818
    %941 = vmatprep.subr.bf16.mxu0 0
    %942 = vmatpush1.bf16.msra.mxu0 %v819
    %943 = vmatprep.subr.bf16.mxu0 0
    %944 = vmatpush1.bf16.msra.mxu0 %v820
    %945 = vmatprep.subr.bf16.mxu0 0
    %946 = vmatpush1.bf16.msra.mxu0 %v821
    %947 = vmatprep.subr.bf16.mxu0 0
    %948 = vmatpush1.bf16.msra.mxu0 %v822
    %949 = vmatprep.subr.bf16.mxu0 0
    %950 = vmatpush1.bf16.msra.mxu0 %v823
    %951 = vmatprep.subr.bf16.mxu0 0
    %952 = vmatpush1.bf16.msra.mxu0 0
    %953 = vmatprep.subr.bf16.mxu0 0
    %954 = vmatpush1.bf16.msra.mxu0 0
    %955 = vmatprep.subr.bf16.mxu0 0
    %956 = vmatpush1.bf16.msra.mxu0 0
    %957 = vmatprep.subr.bf16.mxu0 0
    %958 = vmatpush1.bf16.msra.mxu0 0
    %959 = vmatprep.subr.bf16.mxu0 0
    %960 = vmatpush1.bf16.msra.mxu0 0
    %961 = vmatprep.subr.bf16.mxu0 0
    %962 = vmatpush1.bf16.msra.mxu0 0
    %963 = vmatprep.subr.bf16.mxu0 0
    %964 = vmatpush1.bf16.msra.mxu0 0
    %965 = vmatprep.subr.bf16.mxu0 0
    %966 = vmatpush1.bf16.msra.mxu0 0
    %967 = vmatprep.mubr.bf16.mxu0 0
    %968 = vmatmul.mubr.bf16.gmra.mrb[0].mxu0 %v879
    %v969 = vpop.f32.mrb[0].mxu0
    %v970 = vadd.f32 %v597, %v969
    %v971 = vpop.f32.mrb[0].mxu0
    %v972 = vpop.f32.mrb[0].mxu0
    %v973 = vpop.f32.mrb[0].mxu0
    %974 = vdwg.mxu0
    %v975 = vmul.f32 %v927, %v970
    %v976 = vadd.f32 %v578, %v975
    %v977 = vtanh.pop %v976
    %v978 = vsub.f32 1.0, %v934
    %v979 = vmul.f32 %v978, %v977
    %v980 = vmul.f32 %v934, %v878
    %v981 = vadd.f32 %v979, %v980
    %v982 = vpack.c.bf16 %v981, %v981
    %983 = vmatprep.subr.bf16.mxu0 %v682
    %984 = vmatpush1.bf16.msra.mxu0 %v681
    %985 = vmatprep.subr.bf16.mxu0 %v684
    %986 = vmatpush1.bf16.msra.mxu0 %v683
    %987 = vmatprep.subr.bf16.mxu0 %v686
    %988 = vmatpush1.bf16.msra.mxu0 %v685
    %989 = vmatprep.subr.bf16.mxu0 %v688
    %990 = vmatpush1.bf16.msra.mxu0 %v687
    %991 = vmatprep.subr.bf16.mxu0 %v690
    %992 = vmatpush1.bf16.msra.mxu0 %v689
    %993 = vmatprep.subr.bf16.mxu0 %v692
    %994 = vmatpush1.bf16.msra.mxu0 %v691
    %995 = vmatprep.subr.bf16.mxu0 %v694
    %996 = vmatpush1.bf16.msra.mxu0 %v693
    %997 = vmatprep.subr.bf16.mxu0 %v696
    %998 = vmatpush1.bf16.msra.mxu0 %v695
    %999 = vmatprep.subr.bf16.mxu0 0
    %1000 = vmatpush1.bf16.msra.mxu0 0
    %1001 = vmatprep.subr.bf16.mxu0 0
    %1002 = vmatpush1.bf16.msra.mxu0 0
    %1003 = vmatprep.subr.bf16.mxu0 0
    %1004 = vmatpush1.bf16.msra.mxu0 0
    %1005 = vmatprep.subr.bf16.mxu0 0
    %1006 = vmatpush1.bf16.msra.mxu0 0
    %1007 = vmatprep.subr.bf16.mxu0 0
    %1008 = vmatpush1.bf16.msra.mxu0 0
    %1009 = vmatprep.subr.bf16.mxu0 0
    %1010 = vmatpush1.bf16.msra.mxu0 0
    %1011 = vmatprep.subr.bf16.mxu0 0
    %1012 = vmatpush1.bf16.msra.mxu0 0
    %1013 = vmatprep.subr.bf16.mxu0 0
    %1014 = vmatpush1.bf16.msra.mxu0 0
    %1015 = vmatprep.mubr.bf16.mxu0 0
    %1016 = vmatmul.mubr.bf16.gmra.mrb[0].mxu0 %v982
    %v1017 = vpop.f32.mrb[0].mxu0
    %v1018 = vadd.f32 0.0, %v1017
    %v1019 = vpop.f32.mrb[0].mxu0
    %v1020 = vadd.f32 0.0, %v1019
    %v1021 = vpop.f32.mrb[0].mxu0
    %v1022 = vpop.f32.mrb[0].mxu0
    %1023 = vdwg.mxu0
    %v1024 = vadd.f32 %v521, %v1018
    %v1025 = vxor.u32 %v1024, 2147483648
    %v1026 = vmul.f32 %v1025, 1.442695
    %v1027 = vpow.pop %v1026
    %v1028 = vadd.f32 %v1027, 1.0
    %v1029 = vrcp.pop %v1028
    %v1030 = vmul.f32 1.0, %v1029
    %v1031 = vadd.f32 %v523, %v1020
    %v1032 = vxor.u32 %v1031, 2147483648
    %v1033 = vmul.f32 %v1032, 1.442695
    %v1034 = vpow.pop %v1033
    %v1035 = vadd.f32 %v1034, 1.0
    %v1036 = vrcp.pop %v1035
    %v1037 = vmul.f32 1.0, %v1036
    %1038 = vmatprep.subr.bf16.mxu0 0
    %1039 = vmatpush1.bf16.msra.mxu0 %v816
    %1040 = vmatprep.subr.bf16.mxu0 0
    %1041 = vmatpush1.bf16.msra.mxu0 %v817
    %1042 = vmatprep.subr.bf16.mxu0 0
    %1043 = vmatpush1.bf16.msra.mxu0 %v818
    %1044 = vmatprep.subr.bf16.mxu0 0
    %1045 = vmatpush1.bf16.msra.mxu0 %v819
    %1046 = vmatprep.subr.bf16.mxu0 0
    %1047 = vmatpush1.bf16.msra.mxu0 %v820
    %1048 = vmatprep.subr.bf16.mxu0 0
    %1049 = vmatpush1.bf16.msra.mxu0 %v821
    %1050 = vmatprep.subr.bf16.mxu0 0
    %1051 = vmatpush1.bf16.msra.mxu0 %v822
    %1052 = vmatprep.subr.bf16.mxu0 0
    %1053 = vmatpush1.bf16.msra.mxu0 %v823
    %1054 = vmatprep.subr.bf16.mxu0 0
    %1055 = vmatpush1.bf16.msra.mxu0 0
    %1056 = vmatprep.subr.bf16.mxu0 0
    %1057 = vmatpush1.bf16.msra.mxu0 0
    %1058 = vmatprep.subr.bf16.mxu0 0
    %1059 = vmatpush1.bf16.msra.mxu0 0
    %1060 = vmatprep.subr.bf16.mxu0 0
    %1061 = vmatpush1.bf16.msra.mxu0 0
    %1062 = vmatprep.subr.bf16.mxu0 0
    %1063 = vmatpush1.bf16.msra.mxu0 0
    %1064 = vmatprep.subr.bf16.mxu0 0
    %1065 = vmatpush1.bf16.msra.mxu0 0
    %1066 = vmatprep.subr.bf16.mxu0 0
    %1067 = vmatpush1.bf16.msra.mxu0 0
    %1068 = vmatprep.subr.bf16.mxu0 0
    %1069 = vmatpush1.bf16.msra.mxu0 0
    %1070 = vmatprep.mubr.bf16.mxu0 0
    %1071 = vmatmul.mubr.bf16.gmra.mrb[0].mxu0 %v982
    %v1072 = vpop.f32.mrb[0].mxu0
    %v1073 = vadd.f32 %v597, %v1072
    %v1074 = vpop.f32.mrb[0].mxu0
    %v1075 = vpop.f32.mrb[0].mxu0
    %v1076 = vpop.f32.mrb[0].mxu0
    %1077 = vdwg.mxu0
    %v1078 = vmul.f32 %v1030, %v1073
    %v1079 = vadd.f32 %v581, %v1078
    %v1080 = vtanh.pop %v1079
    %v1081 = vsub.f32 1.0, %v1037
    %v1082 = vmul.f32 %v1081, %v1080
    %v1083 = vmul.f32 %v1037, %v981
    %v1084 = vadd.f32 %v1082, %v1083
    %v1085 = vpack.c.bf16 %v1084, %v1084
    %1086 = vmatprep.subr.bf16.mxu0 %v682
    %1087 = vmatpush1.bf16.msra.mxu0 %v681
    %1088 = vmatprep.subr.bf16.mxu0 %v684
    %1089 = vmatpush1.bf16.msra.mxu0 %v683
    %1090 = vmatprep.subr.bf16.mxu0 %v686
    %1091 = vmatpush1.bf16.msra.mxu0 %v685
    %1092 = vmatprep.subr.bf16.mxu0 %v688
    %1093 = vmatpush1.bf16.msra.mxu0 %v687
    %1094 = vmatprep.subr.bf16.mxu0 %v690
    %1095 = vmatpush1.bf16.msra.mxu0 %v689
    %1096 = vmatprep.subr.bf16.mxu0 %v692
    %1097 = vmatpush1.bf16.msra.mxu0 %v691
    %1098 = vmatprep.subr.bf16.mxu0 %v694
    %1099 = vmatpush1.bf16.msra.mxu0 %v693
    %1100 = vmatprep.subr.bf16.mxu0 %v696
    %1101 = vmatpush1.bf16.msra.mxu0 %v695
    %1102 = vmatprep.subr.bf16.mxu0 0
    %1103 = vmatpush1.bf16.msra.mxu0 0
    %1104 = vmatprep.subr.bf16.mxu0 0
    %1105 = vmatpush1.bf16.msra.mxu0 0
    %1106 = vmatprep.subr.bf16.mxu0 0
    %1107 = vmatpush1.bf16.msra.mxu0 0
    %1108 = vmatprep.subr.bf16.mxu0 0
    %1109 = vmatpush1.bf16.msra.mxu0 0
    %1110 = vmatprep.subr.bf16.mxu0 0
    %1111 = vmatpush1.bf16.msra.mxu0 0
    %1112 = vmatprep.subr.bf16.mxu0 0
    %1113 = vmatpush1.bf16.msra.mxu0 0
    %1114 = vmatprep.subr.bf16.mxu0 0
    %1115 = vmatpush1.bf16.msra.mxu0 0
    %1116 = vmatprep.subr.bf16.mxu0 0
    %1117 = vmatpush1.bf16.msra.mxu0 0
    %1118 = vmatprep.mubr.bf16.mxu0 0
    %1119 = vmatmul.mubr.bf16.gmra.mrb[0].mxu0 %v1085
    %v1120 = vpop.f32.mrb[0].mxu0
    %v1121 = vadd.f32 0.0, %v1120
    %v1122 = vpop.f32.mrb[0].mxu0
    %v1123 = vadd.f32 0.0, %v1122
    %v1124 = vpop.f32.mrb[0].mxu0
    %v1125 = vpop.f32.mrb[0].mxu0
    %1126 = vdwg.mxu0
    %v1127 = vadd.f32 %v527, %v1121
    %v1128 = vxor.u32 %v1127, 2147483648
    %v1129 = vmul.f32 %v1128, 1.442695
    %v1130 = vpow.pop %v1129
    %v1131 = vadd.f32 %v1130, 1.0
    %v1132 = vrcp.pop %v1131
    %v1133 = vmul.f32 1.0, %v1132
    %v1134 = vadd.f32 %v529, %v1123
    %v1135 = vxor.u32 %v1134, 2147483648
    %v1136 = vmul.f32 %v1135, 1.442695
    %v1137 = vpow.pop %v1136
    %v1138 = vadd.f32 %v1137, 1.0
    %v1139 = vrcp.pop %v1138
    %v1140 = vmul.f32 1.0, %v1139
    %1141 = vmatprep.subr.bf16.mxu0 0
    %1142 = vmatpush1.bf16.msra.mxu0 %v816
    %1143 = vmatprep.subr.bf16.mxu0 0
    %1144 = vmatpush1.bf16.msra.mxu0 %v817
    %1145 = vmatprep.subr.bf16.mxu0 0
    %1146 = vmatpush1.bf16.msra.mxu0 %v818
    %1147 = vmatprep.subr.bf16.mxu0 0
    %1148 = vmatpush1.bf16.msra.mxu0 %v819
    %1149 = vmatprep.subr.bf16.mxu0 0
    %1150 = vmatpush1.bf16.msra.mxu0 %v820
    %1151 = vmatprep.subr.bf16.mxu0 0
    %1152 = vmatpush1.bf16.msra.mxu0 %v821
    %1153 = vmatprep.subr.bf16.mxu0 0
    %1154 = vmatpush1.bf16.msra.mxu0 %v822
    %1155 = vmatprep.subr.bf16.mxu0 0
    %1156 = vmatpush1.bf16.msra.mxu0 %v823
    %1157 = vmatprep.subr.bf16.mxu0 0
    %1158 = vmatpush1.bf16.msra.mxu0 0
    %1159 = vmatprep.subr.bf16.mxu0 0
    %1160 = vmatpush1.bf16.msra.mxu0 0
    %1161 = vmatprep.subr.bf16.mxu0 0
    %1162 = vmatpush1.bf16.msra.mxu0 0
    %1163 = vmatprep.subr.bf16.mxu0 0
    %1164 = vmatpush1.bf16.msra.mxu0 0
    %1165 = vmatprep.subr.bf16.mxu0 0
    %1166 = vmatpush1.bf16.msra.mxu0 0
    %1167 = vmatprep.subr.bf16.mxu0 0
    %1168 = vmatpush1.bf16.msra.mxu0 0
    %1169 = vmatprep.subr.bf16.mxu0 0
    %1170 = vmatpush1.bf16.msra.mxu0 0
    %1171 = vmatprep.subr.bf16.mxu0 0
    %1172 = vmatpush1.bf16.msra.mxu0 0
    %1173 = vmatprep.mubr.bf16.mxu0 0
    %1174 = vmatmul.mubr.bf16.gmra.mrb[0].mxu0 %v1085
    %v1175 = vpop.f32.mrb[0].mxu0
    %v1176 = vadd.f32 %v597, %v1175
    %v1177 = vpop.f32.mrb[0].mxu0
    %v1178 = vpop.f32.mrb[0].mxu0
    %v1179 = vpop.f32.mrb[0].mxu0
    %1180 = vdwg.mxu0
    %v1181 = vmul.f32 %v1133, %v1176
    %v1182 = vadd.f32 %v586, %v1181
    %v1183 = vtanh.pop %v1182
    %v1184 = vsub.f32 1.0, %v1140
    %v1185 = vmul.f32 %v1184, %v1183
    %v1186 = vmul.f32 %v1140, %v1084
    %v1187 = vadd.f32 %v1185, %v1186
    %v1188 = vpack.c.bf16 %v1187, %v1187
    %1189 = vmatprep.subr.bf16.mxu0 %v682
    %1190 = vmatpush1.bf16.msra.mxu0 %v681
    %1191 = vmatprep.subr.bf16.mxu0 %v684
    %1192 = vmatpush1.bf16.msra.mxu0 %v683
    %1193 = vmatprep.subr.bf16.mxu0 %v686
    %1194 = vmatpush1.bf16.msra.mxu0 %v685
    %1195 = vmatprep.subr.bf16.mxu0 %v688
    %1196 = vmatpush1.bf16.msra.mxu0 %v687
    %1197 = vmatprep.subr.bf16.mxu0 %v690
    %1198 = vmatpush1.bf16.msra.mxu0 %v689
    %1199 = vmatprep.subr.bf16.mxu0 %v692
    %1200 = vmatpush1.bf16.msra.mxu0 %v691
    %1201 = vmatprep.subr.bf16.mxu0 %v694
    %1202 = vmatpush1.bf16.msra.mxu0 %v693
    %1203 = vmatprep.subr.bf16.mxu0 %v696
    %1204 = vmatpush1.bf16.msra.mxu0 %v695
    %1205 = vmatprep.subr.bf16.mxu0 0
    %1206 = vmatpush1.bf16.msra.mxu0 0
    %1207 = vmatprep.subr.bf16.mxu0 0
    %1208 = vmatpush1.bf16.msra.mxu0 0
    %1209 = vmatprep.subr.bf16.mxu0 0
    %1210 = vmatpush1.bf16.msra.mxu0 0
    %1211 = vmatprep.subr.bf16.mxu0 0
    %1212 = vmatpush1.bf16.msra.mxu0 0
    %1213 = vmatprep.subr.bf16.mxu0 0
    %1214 = vmatpush1.bf16.msra.mxu0 0
    %1215 = vmatprep.subr.bf16.mxu0 0
    %1216 = vmatpush1.bf16.msra.mxu0 0
    %1217 = vmatprep.subr.bf16.mxu0 0
    %1218 = vmatpush1.bf16.msra.mxu0 0
    %1219 = vmatprep.subr.bf16.mxu0 0
    %1220 = vmatpush1.bf16.msra.mxu0 0
    %1221 = vmatprep.mubr.bf16.mxu0 0
    %1222 = vmatmul.mubr.bf16.gmra.mrb[0].mxu0 %v1188
    %v1223 = vpop.f32.mrb[0].mxu0
    %v1224 = vadd.f32 0.0, %v1223
    %v1225 = vpop.f32.mrb[0].mxu0
    %v1226 = vadd.f32 0.0, %v1225
    %v1227 = vpop.f32.mrb[0].mxu0
    %v1228 = vpop.f32.mrb[0].mxu0
    %1229 = vdwg.mxu0
    %v1230 = vadd.f32 %v531, %v1224
    %v1231 = vxor.u32 %v1230, 2147483648
    %v1232 = vmul.f32 %v1231, 1.442695
    %v1233 = vpow.pop %v1232
    %v1234 = vadd.f32 %v1233, 1.0
    %v1235 = vrcp.pop %v1234
    %v1236 = vmul.f32 1.0, %v1235
    %v1237 = vadd.f32 %v533, %v1226
    %v1238 = vxor.u32 %v1237, 2147483648
    %v1239 = vmul.f32 %v1238, 1.442695
    %v1240 = vpow.pop %v1239
    %v1241 = vadd.f32 %v1240, 1.0
    %v1242 = vrcp.pop %v1241
    %v1243 = vmul.f32 1.0, %v1242
    %1244 = vmatprep.subr.bf16.mxu0 0
    %1245 = vmatpush1.bf16.msra.mxu0 %v816
    %1246 = vmatprep.subr.bf16.mxu0 0
    %1247 = vmatpush1.bf16.msra.mxu0 %v817
    %1248 = vmatprep.subr.bf16.mxu0 0
    %1249 = vmatpush1.bf16.msra.mxu0 %v818
    %1250 = vmatprep.subr.bf16.mxu0 0
    %1251 = vmatpush1.bf16.msra.mxu0 %v819
    %1252 = vmatprep.subr.bf16.mxu0 0
    %1253 = vmatpush1.bf16.msra.mxu0 %v820
    %1254 = vmatprep.subr.bf16.mxu0 0
    %1255 = vmatpush1.bf16.msra.mxu0 %v821
    %1256 = vmatprep.subr.bf16.mxu0 0
    %1257 = vmatpush1.bf16.msra.mxu0 %v822
    %1258 = vmatprep.subr.bf16.mxu0 0
    %1259 = vmatpush1.bf16.msra.mxu0 %v823
    %1260 = vmatprep.subr.bf16.mxu0 0
    %1261 = vmatpush1.bf16.msra.mxu0 0
    %1262 = vmatprep.subr.bf16.mxu0 0
    %1263 = vmatpush1.bf16.msra.mxu0 0
    %1264 = vmatprep.subr.bf16.mxu0 0
    %1265 = vmatpush1.bf16.msra.mxu0 0
    %1266 = vmatprep.subr.bf16.mxu0 0
    %1267 = vmatpush1.bf16.msra.mxu0 0
    %1268 = vmatprep.subr.bf16.mxu0 0
    %1269 = vmatpush1.bf16.msra.mxu0 0
    %1270 = vmatprep.subr.bf16.mxu0 0
    %1271 = vmatpush1.bf16.msra.mxu0 0
    %1272 = vmatprep.subr.bf16.mxu0 0
    %1273 = vmatpush1.bf16.msra.mxu0 0
    %1274 = vmatprep.subr.bf16.mxu0 0
    %1275 = vmatpush1.bf16.msra.mxu0 0
    %1276 = vmatprep.mubr.bf16.mxu0 0
    %1277 = vmatmul.mubr.bf16.gmra.mrb[0].mxu0 %v1188
    %v1278 = vpop.f32.mrb[0].mxu0
    %v1279 = vadd.f32 %v597, %v1278
    %v1280 = vpop.f32.mrb[0].mxu0
    %v1281 = vpop.f32.mrb[0].mxu0
    %v1282 = vpop.f32.mrb[0].mxu0
    %1283 = vdwg.mxu0
    %v1284 = vmul.f32 %v1236, %v1279
    %v1285 = vadd.f32 %v589, %v1284
    %v1286 = vtanh.pop %v1285
    %v1287 = vsub.f32 1.0, %v1243
    %v1288 = vmul.f32 %v1287, %v1286
    %v1289 = vmul.f32 %v1243, %v1187
    %v1290 = vadd.f32 %v1288, %v1289
    %v1291 = vpack.c.bf16 %v1290, %v1290
    %v1292 = vld [vmem:[#allocation10] sm:$0xf]
    %v1293 = vld [vmem:[#allocation10 + $0x4] sm:$0xf]
    %v1294 = vld [vmem:[#allocation10 + $0x8] sm:$0xf]
    %v1295 = vld [vmem:[#allocation10 + $0xc] sm:$0xf]
    %v1296 = vld [vmem:[#allocation10 + $0x10] sm:$0xf]
    %v1297 = vld [vmem:[#allocation10 + $0x14] sm:$0xf]
    %v1298 = vld [vmem:[#allocation10 + $0x18] sm:$0xf]
    %v1299 = vld [vmem:[#allocation10 + $0x1c] sm:$0xf]
    %v1300 = vld [vmem:[#allocation10 + $0x20] sm:$0xf]
    %v1301 = vld [vmem:[#allocation10 + $0x24] sm:$0xf]
    %v1302 = vld [vmem:[#allocation10 + $0x28] sm:$0xf]
    %v1303 = vld [vmem:[#allocation10 + $0x2c] sm:$0xf]
    %v1304 = vld [vmem:[#allocation10 + $0x30] sm:$0xf]
    %v1305 = vld [vmem:[#allocation10 + $0x34] sm:$0xf]
    %v1306 = vld [vmem:[#allocation10 + $0x38] sm:$0xf]
    %v1307 = vld [vmem:[#allocation10 + $0x3c] sm:$0xf]
    %v1308 = vld [vmem:[%s7] sm:$0x1]
    %v1310 = vlaneseq
    %v1311 = vshrl.u32 %v1310, 7
    %v1312 = vsub.s32 0, %v1311
    %v1313 = vrot.slane %v1308, %v1312
    %v1331 = vunpack.c.l.b16 %v1292
    %v1332 = vunpack.c.l.b16 %v1293
    %v1333 = vunpack.c.l.b16 %v1294
    %v1334 = vunpack.c.l.b16 %v1295
    %v1335 = vunpack.c.l.b16 %v1296
    %v1336 = vunpack.c.l.b16 %v1297
    %v1337 = vunpack.c.l.b16 %v1298
    %v1338 = vunpack.c.l.b16 %v1299
    %v1339 = vunpack.c.l.b16 %v1300
    %v1340 = vunpack.c.l.b16 %v1301
    %v1341 = vunpack.c.l.b16 %v1302
    %v1342 = vunpack.c.l.b16 %v1303
    %v1343 = vunpack.c.l.b16 %v1304
    %v1344 = vunpack.c.l.b16 %v1305
    %v1345 = vunpack.c.l.b16 %v1306
    %v1346 = vunpack.c.l.b16 %v1307
    %v1347 = vpack.c.b16 %v1332, %v1331
    %v1348 = vpack.c.b16 %v1334, %v1333
    %v1349 = vpack.c.b16 %v1336, %v1335
    %v1350 = vpack.c.b16 %v1338, %v1337
    %v1351 = vpack.c.b16 %v1340, %v1339
    %v1352 = vpack.c.b16 %v1342, %v1341
    %v1353 = vpack.c.b16 %v1344, %v1343
    %v1354 = vpack.c.b16 %v1346, %v1345
    %1363 = vmatprep.subr.bf16.mxu0 0
    %1364 = vmatpush1.bf16.msra.mxu0 %v1347
    %1365 = vmatprep.subr.bf16.mxu0 0
    %1366 = vmatpush1.bf16.msra.mxu0 %v1348
    %1367 = vmatprep.subr.bf16.mxu0 0
    %1368 = vmatpush1.bf16.msra.mxu0 %v1349
    %1369 = vmatprep.subr.bf16.mxu0 0
    %1370 = vmatpush1.bf16.msra.mxu0 %v1350
    %1371 = vmatprep.subr.bf16.mxu0 0
    %1372 = vmatpush1.bf16.msra.mxu0 %v1351
    %1373 = vmatprep.subr.bf16.mxu0 0
    %1374 = vmatpush1.bf16.msra.mxu0 %v1352
    %1375 = vmatprep.subr.bf16.mxu0 0
    %1376 = vmatpush1.bf16.msra.mxu0 %v1353
    %1377 = vmatprep.subr.bf16.mxu0 0
    %1378 = vmatpush1.bf16.msra.mxu0 %v1354
    %1379 = vmatprep.subr.bf16.mxu0 0
    %1380 = vmatpush1.bf16.msra.mxu0 0
    %1381 = vmatprep.subr.bf16.mxu0 0
    %1382 = vmatpush1.bf16.msra.mxu0 0
    %1383 = vmatprep.subr.bf16.mxu0 0
    %1384 = vmatpush1.bf16.msra.mxu0 0
    %1385 = vmatprep.subr.bf16.mxu0 0
    %1386 = vmatpush1.bf16.msra.mxu0 0
    %1387 = vmatprep.subr.bf16.mxu0 0
    %1388 = vmatpush1.bf16.msra.mxu0 0
    %1389 = vmatprep.subr.bf16.mxu0 0
    %1390 = vmatpush1.bf16.msra.mxu0 0
    %1391 = vmatprep.subr.bf16.mxu0 0
    %1392 = vmatpush1.bf16.msra.mxu0 0
    %1393 = vmatprep.subr.bf16.mxu0 0
    %1394 = vmatpush1.bf16.msra.mxu0 0
    %1395 = vmatprep.mubr.bf16.mxu0 0
    %1396 = vmatmul.mubr.bf16.gmra.mrb[0].mxu0 %v1291
    %v1397 = vpop.f32.mrb[0].mxu0
    %v1398 = vadd.f32 %v1313, %v1397
    %v1399 = vpop.f32.mrb[0].mxu0
    %v1400 = vpop.f32.mrb[0].mxu0
    %v1401 = vpop.f32.mrb[0].mxu0
    %1402 = vdwg.mxu0
    %1403 = vst [vmem:[#allocation11] sm:$0xff] %v1398
    // Predicated region
    $region54: #{tpu_custom_call.1} parent=1 // pred_check
      _
    $region55: #{tpu_custom_call.1} parent=1 // pred_check_branch
      %1405 = sbr.rel (0) target = $region57
    $region56: #{tpu_custom_call.1} parent=1 // pred_region
      %s1407 = ssub.s32 128, 128
      %1408 = vsyncadd [#allocation4], %s1407
      %s1410 = sshll.u32 [#allocation11], 4
      %s1411 = int_to_ptr.vmem [resolvable:$true] %s1410
      %1413 = dma.vmem_to_hbm [thread:$0]  %s1411, 128, %s8, [#allocation4]
    $region57: #{tpu_custom_call.1} parent=1 // pred_fallthru
      _
    // Predicated region
    $region58: #{tpu_custom_call.1} parent=1 // pred_check
      _
    $region59: #{tpu_custom_call.1} parent=1 // pred_check_branch
      %1415 = sbr.rel (0) target = $region61
    $region60: #{tpu_custom_call.1} parent=1 // pred_region
      %1416 = dma.done [#allocation4], 128
    $region61: #{tpu_custom_call.1} parent=1 // pred_fallthru
      _
    %1417 = vsyncpa [#allocation3], 1
    %1418 = vsyncpa [#allocation6], 1
    %1419 = vsyncpa [#allocation9], 1
    %1420 = vsyncpa [#allocation4], 1

</llo_original>
